<compile_context>
chip_gen: v7x
topology: tpu7x:2x2x1
jax: 0.10.0
libtpu: 0.0.40
codegen_flags: <defaults>
</compile_context>

<pallas_src>
import numpy as np
import jax
import jax.numpy as jnp
from jax.experimental import pallas as pl
from jax.experimental.pallas import tpu as pltpu

# Problem sizes (fixed by the module)
N, CIN, H, W = 2, 3, 16, 16
KH, KW = 3, 3
C1, C2 = 8, 16
HO, WO = H - KH + 1, W - KW + 1          # 14, 14 (stride 1, no padding)
HW = H * W                               # 256  (2 full 128-lane tiles)
NTAP = KH * KW                           # 9


def fused_conv_kernel(x_ref, w1_ref, b1_ref, w2_ref, b2_ref, o_ref):
    # x_ref : (N, CIN, HW)      input, pixels lane-dense (HW = 256)
    # w1_ref: (NTAP, C1, CIN)   conv1 weights, one (C1, CIN) slab per (kh, kw) tap
    # b1_ref: (C1, 1)
    # w2_ref: (C2, C1)          1x1 conv weights
    # b2_ref: (C2, 1)
    # o_ref : (N, C2, HW)       output, pixels lane-dense; valid 14x14 window
    #                           is sliced out by the wrapper
    for n in range(N):                                   # static unroll (N = 2)
        xn = x_ref[n]                                    # (CIN, HW)
        acc = None
        for t in range(NTAP):                            # static unroll (9 taps)
            kh, kw = divmod(t, KW)
            off = kh * W + kw
            # xs[c, p] = xn[c, p + off]; wraparound lanes fall outside the
            # kept 14x14 output window, so they never affect the result.
            xs = pltpu.roll(xn, HW - off, axis=1) if off else xn
            contrib = jnp.dot(w1_ref[t], xs,
                              preferred_element_type=jnp.float32)     # (C1, HW)
            acc = contrib if acc is None else acc + contrib
        z1 = acc + b1_ref[...]                           # (C1, HW)
        a1 = z1 * jax.nn.sigmoid(z1)                     # SiLU

        z2 = jnp.dot(w2_ref[...], a1,
                     preferred_element_type=jnp.float32) + b2_ref[...]  # (C2, HW)
        o_ref[n] = z2 * jax.nn.sigmoid(z2)               # SiLU, unmasked 256-lane store


@jax.jit
def test_model_forward(x_nchw, w1, b1, w2, b2):
    """x_nchw: (N, CIN, H, W) f32; w1: (C1, CIN, KH, KW); b1: (C1,);
       w2: (C2, C1, 1, 1); b2: (C2,).  Returns (N, C2, HO, WO) like PyTorch."""
    n = x_nchw.shape[0]

    x_flat = x_nchw.reshape(n, CIN, HW)                              # free reshape
    # Tap-major weight slabs: w1_taps[t] = w1[:, :, kh, kw] with t = kh*KW + kw.
    w1_taps = jnp.transpose(w1, (2, 3, 0, 1)).reshape(NTAP, C1, CIN)  # (9, C1, CIN)
    b1_col = b1.reshape(C1, 1)
    w2_mat = w2.reshape(C2, C1)
    b2_col = b2.reshape(C2, 1)

    flops = 2 * n * HW * (C1 * CIN * NTAP + C2 * C1)
    transcendentals = n * HW * (C1 + C2)                  # one sigmoid per activation
    bytes_accessed = 4 * (n * CIN * HW + NTAP * C1 * CIN + C1
                          + C2 * C1 + C2 + n * C2 * HW)

    out = pl.pallas_call(
        fused_conv_kernel,
        out_shape=jax.ShapeDtypeStruct((n, C2, HW), jnp.float32),
        grid_spec=pl.GridSpec(
            grid=(1,),                                    # single step: kernel is overhead-bound
            in_specs=[
                pl.BlockSpec((n, CIN, HW), lambda i: (0, 0, 0)),
                pl.BlockSpec((NTAP, C1, CIN), lambda i: (0, 0, 0)),
                pl.BlockSpec((C1, 1), lambda i: (0, 0)),
                pl.BlockSpec((C2, C1), lambda i: (0, 0)),
                pl.BlockSpec((C2, 1), lambda i: (0, 0)),
            ],
            out_specs=pl.BlockSpec((n, C2, HW), lambda i: (0, 0, 0)),
        ),
        cost_estimate=pl.CostEstimate(
            flops=flops,
            transcendentals=transcendentals,
            bytes_accessed=bytes_accessed),
    )(x_flat, w1_taps, b1_col, w2_mat, b2_col)

    # Keep the valid convolution window; reshape is free, slice is tiny.
    return out.reshape(n, C2, H, W)[:, :, :HO, :WO]


def reference_forward(x_nchw, w1, b1, w2, b2):
    """Pure-JAX reference (lax conv) for correctness checking."""
    y0 = jax.lax.conv_general_dilated(
        x_nchw, w1, window_strides=(1, 1), padding="VALID",
        dimension_numbers=("NCHW", "OIHW", "NCHW"))
    y0 = y0 + b1.reshape(1, C1, 1, 1)
    a1 = y0 * jax.nn.sigmoid(y0)
    y1 = jax.lax.conv_general_dilated(
        a1, w2, window_strides=(1, 1), padding="VALID",
        dimension_numbers=("NCHW", "OIHW", "NCHW"))
    y1 = y1 + b2.reshape(1, C2, 1, 1)
    return y1 * jax.nn.sigmoid(y1)


if __name__ == "__main__":
    key = jax.random.PRNGKey(0)
    kx, kw1, kb1, kw2, kb2 = jax.random.split(key, 5)

    # Deterministic synthetic parameters in PyTorch layouts.
    x = jax.random.normal(kx, (N, CIN, H, W), dtype=jnp.float32)
    w1 = jax.random.normal(kw1, (C1, CIN, KH, KW), dtype=jnp.float32) * 0.1
    b1 = jax.random.normal(kb1, (C1,), dtype=jnp.float32) * 0.1
    w2 = jax.random.normal(kw2, (C2, C1, 1, 1), dtype=jnp.float32) * 0.1
    b2 = jax.random.normal(kb2, (C2,), dtype=jnp.float32) * 0.1

    out = jax.block_until_ready(test_model_forward(x, w1, b1, w2, b2))
    ref = jax.block_until_ready(reference_forward(x, w1, b1, w2, b2))

    assert out.shape == (N, C2, HO, WO), out.shape
    np.testing.assert_allclose(np.asarray(out), np.asarray(ref), atol=1e-4, rtol=1e-4)
    print("KERNEL_OK")
</pallas_src>

<mosaic_0001>
module attributes {stable_mosaic.version = 11 : i64} {
  func.func @fused_conv_kernel(%arg0: i32, %arg1: memref<2x3x256xf32, #tpu.memory_space<vmem>>, %arg2: memref<9x8x3xf32, #tpu.memory_space<vmem>>, %arg3: memref<8x1xf32, #tpu.memory_space<vmem>>, %arg4: memref<16x8xf32, #tpu.memory_space<vmem>>, %arg5: memref<16x1xf32, #tpu.memory_space<vmem>>, %arg6: memref<2x16x256xf32, #tpu.memory_space<vmem>>) attributes {dimension_semantics = [#tpu.dimension_semantics<arbitrary>], iteration_bounds = array<i64: 1>, scalar_prefetch = 0 : i64, scratch_operands = 0 : i64, tpu.core_type = #tpu.core_type<tc>, window_params = [{pipeline_mode = #tpu.pipeline_mode<synchronous>, transform_indices = @transform_0, window_bounds = array<i64: 2, 3, 256>}, {pipeline_mode = #tpu.pipeline_mode<synchronous>, transform_indices = @transform_1, window_bounds = array<i64: 9, 8, 3>}, {pipeline_mode = #tpu.pipeline_mode<synchronous>, transform_indices = @transform_2, window_bounds = array<i64: 8, 1>}, {pipeline_mode = #tpu.pipeline_mode<synchronous>, transform_indices = @transform_3, window_bounds = array<i64: 16, 8>}, {pipeline_mode = #tpu.pipeline_mode<synchronous>, transform_indices = @transform_4, window_bounds = array<i64: 16, 1>}, {pipeline_mode = #tpu.pipeline_mode<synchronous>, transform_indices = @transform_5, window_bounds = array<i64: 2, 16, 256>}]} {
    %c0 = arith.constant 0 : index
    %c0_0 = arith.constant 0 : index
    %c0_1 = arith.constant 0 : index
    %0 = vector.load %arg1[%c0, %c0_0, %c0_1] : memref<2x3x256xf32, #tpu.memory_space<vmem>>, vector<1x3x256xf32>
    %1 = vector.shape_cast %0 : vector<1x3x256xf32> to vector<3x256xf32>
    %c0_2 = arith.constant 0 : index
    %c0_3 = arith.constant 0 : index
    %c0_4 = arith.constant 0 : index
    %2 = vector.load %arg2[%c0_2, %c0_3, %c0_4] : memref<9x8x3xf32, #tpu.memory_space<vmem>>, vector<1x8x3xf32>
    %3 = vector.shape_cast %2 : vector<1x8x3xf32> to vector<8x3xf32>
    %cst = arith.constant dense<0.000000e+00> : vector<8x256xf32>
    %4 = tpu.matmul %3, %1, %cst {dimension_numbers = #tpu.dot_dimension_numbers<[1], [0], [0], [1], [0, 0, 1, 1], [], []>} : vector<8x3xf32>, vector<3x256xf32>, vector<8x256xf32> -> vector<8x256xf32>
    %c255_i32 = arith.constant 255 : i32
    %5 = tpu.dynamic_rotate %1 by %c255_i32 dim 1 : vector<3x256xf32>, i32 -> vector<3x256xf32>
    %c1 = arith.constant 1 : index
    %c0_5 = arith.constant 0 : index
    %c0_6 = arith.constant 0 : index
    %6 = vector.load %arg2[%c1, %c0_5, %c0_6] : memref<9x8x3xf32, #tpu.memory_space<vmem>>, vector<1x8x3xf32>
    %7 = vector.shape_cast %6 : vector<1x8x3xf32> to vector<8x3xf32>
    %cst_7 = arith.constant dense<0.000000e+00> : vector<8x256xf32>
    %8 = tpu.matmul %7, %5, %cst_7 {dimension_numbers = #tpu.dot_dimension_numbers<[1], [0], [0], [1], [0, 0, 1, 1], [], []>} : vector<8x3xf32>, vector<3x256xf32>, vector<8x256xf32> -> vector<8x256xf32>
    %9 = arith.addf %4, %8 : vector<8x256xf32>
    %c254_i32 = arith.constant 254 : i32
    %10 = tpu.dynamic_rotate %1 by %c254_i32 dim 1 : vector<3x256xf32>, i32 -> vector<3x256xf32>
    %c2 = arith.constant 2 : index
    %c0_8 = arith.constant 0 : index
    %c0_9 = arith.constant 0 : index
    %11 = vector.load %arg2[%c2, %c0_8, %c0_9] : memref<9x8x3xf32, #tpu.memory_space<vmem>>, vector<1x8x3xf32>
    %12 = vector.shape_cast %11 : vector<1x8x3xf32> to vector<8x3xf32>
    %cst_10 = arith.constant dense<0.000000e+00> : vector<8x256xf32>
    %13 = tpu.matmul %12, %10, %cst_10 {dimension_numbers = #tpu.dot_dimension_numbers<[1], [0], [0], [1], [0, 0, 1, 1], [], []>} : vector<8x3xf32>, vector<3x256xf32>, vector<8x256xf32> -> vector<8x256xf32>
    %14 = arith.addf %9, %13 : vector<8x256xf32>
    %c240_i32 = arith.constant 240 : i32
    %15 = tpu.dynamic_rotate %1 by %c240_i32 dim 1 : vector<3x256xf32>, i32 -> vector<3x256xf32>
    %c3 = arith.constant 3 : index
    %c0_11 = arith.constant 0 : index
    %c0_12 = arith.constant 0 : index
    %16 = vector.load %arg2[%c3, %c0_11, %c0_12] : memref<9x8x3xf32, #tpu.memory_space<vmem>>, vector<1x8x3xf32>
    %17 = vector.shape_cast %16 : vector<1x8x3xf32> to vector<8x3xf32>
    %cst_13 = arith.constant dense<0.000000e+00> : vector<8x256xf32>
    %18 = tpu.matmul %17, %15, %cst_13 {dimension_numbers = #tpu.dot_dimension_numbers<[1], [0], [0], [1], [0, 0, 1, 1], [], []>} : vector<8x3xf32>, vector<3x256xf32>, vector<8x256xf32> -> vector<8x256xf32>
    %19 = arith.addf %14, %18 : vector<8x256xf32>
    %c239_i32 = arith.constant 239 : i32
    %20 = tpu.dynamic_rotate %1 by %c239_i32 dim 1 : vector<3x256xf32>, i32 -> vector<3x256xf32>
    %c4 = arith.constant 4 : index
    %c0_14 = arith.constant 0 : index
    %c0_15 = arith.constant 0 : index
    %21 = vector.load %arg2[%c4, %c0_14, %c0_15] : memref<9x8x3xf32, #tpu.memory_space<vmem>>, vector<1x8x3xf32>
    %22 = vector.shape_cast %21 : vector<1x8x3xf32> to vector<8x3xf32>
    %cst_16 = arith.constant dense<0.000000e+00> : vector<8x256xf32>
    %23 = tpu.matmul %22, %20, %cst_16 {dimension_numbers = #tpu.dot_dimension_numbers<[1], [0], [0], [1], [0, 0, 1, 1], [], []>} : vector<8x3xf32>, vector<3x256xf32>, vector<8x256xf32> -> vector<8x256xf32>
    %24 = arith.addf %19, %23 : vector<8x256xf32>
    %c238_i32 = arith.constant 238 : i32
    %25 = tpu.dynamic_rotate %1 by %c238_i32 dim 1 : vector<3x256xf32>, i32 -> vector<3x256xf32>
    %c5 = arith.constant 5 : index
    %c0_17 = arith.constant 0 : index
    %c0_18 = arith.constant 0 : index
    %26 = vector.load %arg2[%c5, %c0_17, %c0_18] : memref<9x8x3xf32, #tpu.memory_space<vmem>>, vector<1x8x3xf32>
    %27 = vector.shape_cast %26 : vector<1x8x3xf32> to vector<8x3xf32>
    %cst_19 = arith.constant dense<0.000000e+00> : vector<8x256xf32>
    %28 = tpu.matmul %27, %25, %cst_19 {dimension_numbers = #tpu.dot_dimension_numbers<[1], [0], [0], [1], [0, 0, 1, 1], [], []>} : vector<8x3xf32>, vector<3x256xf32>, vector<8x256xf32> -> vector<8x256xf32>
    %29 = arith.addf %24, %28 : vector<8x256xf32>
    %c224_i32 = arith.constant 224 : i32
    %30 = tpu.dynamic_rotate %1 by %c224_i32 dim 1 : vector<3x256xf32>, i32 -> vector<3x256xf32>
    %c6 = arith.constant 6 : index
    %c0_20 = arith.constant 0 : index
    %c0_21 = arith.constant 0 : index
    %31 = vector.load %arg2[%c6, %c0_20, %c0_21] : memref<9x8x3xf32, #tpu.memory_space<vmem>>, vector<1x8x3xf32>
    %32 = vector.shape_cast %31 : vector<1x8x3xf32> to vector<8x3xf32>
    %cst_22 = arith.constant dense<0.000000e+00> : vector<8x256xf32>
    %33 = tpu.matmul %32, %30, %cst_22 {dimension_numbers = #tpu.dot_dimension_numbers<[1], [0], [0], [1], [0, 0, 1, 1], [], []>} : vector<8x3xf32>, vector<3x256xf32>, vector<8x256xf32> -> vector<8x256xf32>
    %34 = arith.addf %29, %33 : vector<8x256xf32>
    %c223_i32 = arith.constant 223 : i32
    %35 = tpu.dynamic_rotate %1 by %c223_i32 dim 1 : vector<3x256xf32>, i32 -> vector<3x256xf32>
    %c7 = arith.constant 7 : index
    %c0_23 = arith.constant 0 : index
    %c0_24 = arith.constant 0 : index
    %36 = vector.load %arg2[%c7, %c0_23, %c0_24] : memref<9x8x3xf32, #tpu.memory_space<vmem>>, vector<1x8x3xf32>
    %37 = vector.shape_cast %36 : vector<1x8x3xf32> to vector<8x3xf32>
    %cst_25 = arith.constant dense<0.000000e+00> : vector<8x256xf32>
    %38 = tpu.matmul %37, %35, %cst_25 {dimension_numbers = #tpu.dot_dimension_numbers<[1], [0], [0], [1], [0, 0, 1, 1], [], []>} : vector<8x3xf32>, vector<3x256xf32>, vector<8x256xf32> -> vector<8x256xf32>
    %39 = arith.addf %34, %38 : vector<8x256xf32>
    %c222_i32 = arith.constant 222 : i32
    %40 = tpu.dynamic_rotate %1 by %c222_i32 dim 1 : vector<3x256xf32>, i32 -> vector<3x256xf32>
    %c8 = arith.constant 8 : index
    %c0_26 = arith.constant 0 : index
    %c0_27 = arith.constant 0 : index
    %41 = vector.load %arg2[%c8, %c0_26, %c0_27] : memref<9x8x3xf32, #tpu.memory_space<vmem>>, vector<1x8x3xf32>
    %42 = vector.shape_cast %41 : vector<1x8x3xf32> to vector<8x3xf32>
    %cst_28 = arith.constant dense<0.000000e+00> : vector<8x256xf32>
    %43 = tpu.matmul %42, %40, %cst_28 {dimension_numbers = #tpu.dot_dimension_numbers<[1], [0], [0], [1], [0, 0, 1, 1], [], []>} : vector<8x3xf32>, vector<3x256xf32>, vector<8x256xf32> -> vector<8x256xf32>
    %44 = arith.addf %39, %43 : vector<8x256xf32>
    %c0_29 = arith.constant 0 : index
    %c0_30 = arith.constant 0 : index
    %45 = vector.load %arg3[%c0_29, %c0_30] : memref<8x1xf32, #tpu.memory_space<vmem>>, vector<8x1xf32>
    %46 = vector.broadcast %45 : vector<8x1xf32> to vector<8x256xf32>
    %47 = arith.addf %44, %46 : vector<8x256xf32>
    %48 = arith.negf %47 : vector<8x256xf32>
    %49 = math.exp %48 : vector<8x256xf32>
    %cst_31 = arith.constant 1.000000e+00 : f32
    %50 = vector.broadcast %cst_31 : f32 to vector<8x256xf32>
    %51 = arith.addf %50, %49 : vector<8x256xf32>
    %52 = arith.divf %50, %51 : vector<8x256xf32>
    %53 = arith.mulf %47, %52 : vector<8x256xf32>
    %c0_32 = arith.constant 0 : index
    %c0_33 = arith.constant 0 : index
    %54 = vector.load %arg4[%c0_32, %c0_33] : memref<16x8xf32, #tpu.memory_space<vmem>>, vector<16x8xf32>
    %cst_34 = arith.constant dense<0.000000e+00> : vector<16x256xf32>
    %55 = tpu.matmul %54, %53, %cst_34 {dimension_numbers = #tpu.dot_dimension_numbers<[1], [0], [0], [1], [0, 0, 1, 1], [], []>} : vector<16x8xf32>, vector<8x256xf32>, vector<16x256xf32> -> vector<16x256xf32>
    %c0_35 = arith.constant 0 : index
    %c0_36 = arith.constant 0 : index
    %56 = vector.load %arg5[%c0_35, %c0_36] : memref<16x1xf32, #tpu.memory_space<vmem>>, vector<16x1xf32>
    %57 = vector.broadcast %56 : vector<16x1xf32> to vector<16x256xf32>
    %58 = arith.addf %55, %57 : vector<16x256xf32>
    %59 = arith.negf %58 : vector<16x256xf32>
    %60 = math.exp %59 : vector<16x256xf32>
    %cst_37 = arith.constant 1.000000e+00 : f32
    %61 = vector.broadcast %cst_37 : f32 to vector<16x256xf32>
    %62 = arith.addf %61, %60 : vector<16x256xf32>
    %63 = arith.divf %61, %62 : vector<16x256xf32>
    %64 = arith.mulf %58, %63 : vector<16x256xf32>
    %c0_38 = arith.constant 0 : index
    %c0_39 = arith.constant 0 : index
    %c0_40 = arith.constant 0 : index
    %65 = vector.load %arg6[%c0_38, %c0_39, %c0_40] : memref<2x16x256xf32, #tpu.memory_space<vmem>>, vector<1x16x256xf32>
    %66 = vector.shape_cast %65 : vector<1x16x256xf32> to vector<16x256xf32>
    %67 = vector.shape_cast %64 : vector<16x256xf32> to vector<1x16x256xf32>
    tpu.vector_store %arg6[%c0_38, %c0_39, %c0_40], %67 {strides = array<i32>} : memref<2x16x256xf32, #tpu.memory_space<vmem>>, vector<1x16x256xf32>,
    %c1_41 = arith.constant 1 : index
    %c0_42 = arith.constant 0 : index
    %c0_43 = arith.constant 0 : index
    %68 = vector.load %arg1[%c1_41, %c0_42, %c0_43] : memref<2x3x256xf32, #tpu.memory_space<vmem>>, vector<1x3x256xf32>
    %69 = vector.shape_cast %68 : vector<1x3x256xf32> to vector<3x256xf32>
    %c0_44 = arith.constant 0 : index
    %c0_45 = arith.constant 0 : index
    %c0_46 = arith.constant 0 : index
    %70 = vector.load %arg2[%c0_44, %c0_45, %c0_46] : memref<9x8x3xf32, #tpu.memory_space<vmem>>, vector<1x8x3xf32>
    %71 = vector.shape_cast %70 : vector<1x8x3xf32> to vector<8x3xf32>
    %cst_47 = arith.constant dense<0.000000e+00> : vector<8x256xf32>
    %72 = tpu.matmul %71, %69, %cst_47 {dimension_numbers = #tpu.dot_dimension_numbers<[1], [0], [0], [1], [0, 0, 1, 1], [], []>} : vector<8x3xf32>, vector<3x256xf32>, vector<8x256xf32> -> vector<8x256xf32>
    %c255_i32_48 = arith.constant 255 : i32
    %73 = tpu.dynamic_rotate %69 by %c255_i32_48 dim 1 : vector<3x256xf32>, i32 -> vector<3x256xf32>
    %c1_49 = arith.constant 1 : index
    %c0_50 = arith.constant 0 : index
    %c0_51 = arith.constant 0 : index
    %74 = vector.load %arg2[%c1_49, %c0_50, %c0_51] : memref<9x8x3xf32, #tpu.memory_space<vmem>>, vector<1x8x3xf32>
    %75 = vector.shape_cast %74 : vector<1x8x3xf32> to vector<8x3xf32>
    %cst_52 = arith.constant dense<0.000000e+00> : vector<8x256xf32>
    %76 = tpu.matmul %75, %73, %cst_52 {dimension_numbers = #tpu.dot_dimension_numbers<[1], [0], [0], [1], [0, 0, 1, 1], [], []>} : vector<8x3xf32>, vector<3x256xf32>, vector<8x256xf32> -> vector<8x256xf32>
    %77 = arith.addf %72, %76 : vector<8x256xf32>
    %c254_i32_53 = arith.constant 254 : i32
    %78 = tpu.dynamic_rotate %69 by %c254_i32_53 dim 1 : vector<3x256xf32>, i32 -> vector<3x256xf32>
    %c2_54 = arith.constant 2 : index
    %c0_55 = arith.constant 0 : index
    %c0_56 = arith.constant 0 : index
    %79 = vector.load %arg2[%c2_54, %c0_55, %c0_56] : memref<9x8x3xf32, #tpu.memory_space<vmem>>, vector<1x8x3xf32>
    %80 = vector.shape_cast %79 : vector<1x8x3xf32> to vector<8x3xf32>
    %cst_57 = arith.constant dense<0.000000e+00> : vector<8x256xf32>
    %81 = tpu.matmul %80, %78, %cst_57 {dimension_numbers = #tpu.dot_dimension_numbers<[1], [0], [0], [1], [0, 0, 1, 1], [], []>} : vector<8x3xf32>, vector<3x256xf32>, vector<8x256xf32> -> vector<8x256xf32>
    %82 = arith.addf %77, %81 : vector<8x256xf32>
    %c240_i32_58 = arith.constant 240 : i32
    %83 = tpu.dynamic_rotate %69 by %c240_i32_58 dim 1 : vector<3x256xf32>, i32 -> vector<3x256xf32>
    %c3_59 = arith.constant 3 : index
    %c0_60 = arith.constant 0 : index
    %c0_61 = arith.constant 0 : index
    %84 = vector.load %arg2[%c3_59, %c0_60, %c0_61] : memref<9x8x3xf32, #tpu.memory_space<vmem>>, vector<1x8x3xf32>
    %85 = vector.shape_cast %84 : vector<1x8x3xf32> to vector<8x3xf32>
    %cst_62 = arith.constant dense<0.000000e+00> : vector<8x256xf32>
    %86 = tpu.matmul %85, %83, %cst_62 {dimension_numbers = #tpu.dot_dimension_numbers<[1], [0], [0], [1], [0, 0, 1, 1], [], []>} : vector<8x3xf32>, vector<3x256xf32>, vector<8x256xf32> -> vector<8x256xf32>
    %87 = arith.addf %82, %86 : vector<8x256xf32>
    %c239_i32_63 = arith.constant 239 : i32
    %88 = tpu.dynamic_rotate %69 by %c239_i32_63 dim 1 : vector<3x256xf32>, i32 -> vector<3x256xf32>
    %c4_64 = arith.constant 4 : index
    %c0_65 = arith.constant 0 : index
    %c0_66 = arith.constant 0 : index
    %89 = vector.load %arg2[%c4_64, %c0_65, %c0_66] : memref<9x8x3xf32, #tpu.memory_space<vmem>>, vector<1x8x3xf32>
    %90 = vector.shape_cast %89 : vector<1x8x3xf32> to vector<8x3xf32>
    %cst_67 = arith.constant dense<0.000000e+00> : vector<8x256xf32>
    %91 = tpu.matmul %90, %88, %cst_67 {dimension_numbers = #tpu.dot_dimension_numbers<[1], [0], [0], [1], [0, 0, 1, 1], [], []>} : vector<8x3xf32>, vector<3x256xf32>, vector<8x256xf32> -> vector<8x256xf32>
    %92 = arith.addf %87, %91 : vector<8x256xf32>
    %c238_i32_68 = arith.constant 238 : i32
    %93 = tpu.dynamic_rotate %69 by %c238_i32_68 dim 1 : vector<3x256xf32>, i32 -> vector<3x256xf32>
    %c5_69 = arith.constant 5 : index
    %c0_70 = arith.constant 0 : index
    %c0_71 = arith.constant 0 : index
    %94 = vector.load %arg2[%c5_69, %c0_70, %c0_71] : memref<9x8x3xf32, #tpu.memory_space<vmem>>, vector<1x8x3xf32>
    %95 = vector.shape_cast %94 : vector<1x8x3xf32> to vector<8x3xf32>
    %cst_72 = arith.constant dense<0.000000e+00> : vector<8x256xf32>
    %96 = tpu.matmul %95, %93, %cst_72 {dimension_numbers = #tpu.dot_dimension_numbers<[1], [0], [0], [1], [0, 0, 1, 1], [], []>} : vector<8x3xf32>, vector<3x256xf32>, vector<8x256xf32> -> vector<8x256xf32>
    %97 = arith.addf %92, %96 : vector<8x256xf32>
    %c224_i32_73 = arith.constant 224 : i32
    %98 = tpu.dynamic_rotate %69 by %c224_i32_73 dim 1 : vector<3x256xf32>, i32 -> vector<3x256xf32>
    %c6_74 = arith.constant 6 : index
    %c0_75 = arith.constant 0 : index
    %c0_76 = arith.constant 0 : index
    %99 = vector.load %arg2[%c6_74, %c0_75, %c0_76] : memref<9x8x3xf32, #tpu.memory_space<vmem>>, vector<1x8x3xf32>
    %100 = vector.shape_cast %99 : vector<1x8x3xf32> to vector<8x3xf32>
    %cst_77 = arith.constant dense<0.000000e+00> : vector<8x256xf32>
    %101 = tpu.matmul %100, %98, %cst_77 {dimension_numbers = #tpu.dot_dimension_numbers<[1], [0], [0], [1], [0, 0, 1, 1], [], []>} : vector<8x3xf32>, vector<3x256xf32>, vector<8x256xf32> -> vector<8x256xf32>
    %102 = arith.addf %97, %101 : vector<8x256xf32>
    %c223_i32_78 = arith.constant 223 : i32
    %103 = tpu.dynamic_rotate %69 by %c223_i32_78 dim 1 : vector<3x256xf32>, i32 -> vector<3x256xf32>
    %c7_79 = arith.constant 7 : index
    %c0_80 = arith.constant 0 : index
    %c0_81 = arith.constant 0 : index
    %104 = vector.load %arg2[%c7_79, %c0_80, %c0_81] : memref<9x8x3xf32, #tpu.memory_space<vmem>>, vector<1x8x3xf32>
    %105 = vector.shape_cast %104 : vector<1x8x3xf32> to vector<8x3xf32>
    %cst_82 = arith.constant dense<0.000000e+00> : vector<8x256xf32>
    %106 = tpu.matmul %105, %103, %cst_82 {dimension_numbers = #tpu.dot_dimension_numbers<[1], [0], [0], [1], [0, 0, 1, 1], [], []>} : vector<8x3xf32>, vector<3x256xf32>, vector<8x256xf32> -> vector<8x256xf32>
    %107 = arith.addf %102, %106 : vector<8x256xf32>
    %c222_i32_83 = arith.constant 222 : i32
    %108 = tpu.dynamic_rotate %69 by %c222_i32_83 dim 1 : vector<3x256xf32>, i32 -> vector<3x256xf32>
    %c8_84 = arith.constant 8 : index
    %c0_85 = arith.constant 0 : index
    %c0_86 = arith.constant 0 : index
    %109 = vector.load %arg2[%c8_84, %c0_85, %c0_86] : memref<9x8x3xf32, #tpu.memory_space<vmem>>, vector<1x8x3xf32>
    %110 = vector.shape_cast %109 : vector<1x8x3xf32> to vector<8x3xf32>
    %cst_87 = arith.constant dense<0.000000e+00> : vector<8x256xf32>
    %111 = tpu.matmul %110, %108, %cst_87 {dimension_numbers = #tpu.dot_dimension_numbers<[1], [0], [0], [1], [0, 0, 1, 1], [], []>} : vector<8x3xf32>, vector<3x256xf32>, vector<8x256xf32> -> vector<8x256xf32>
    %112 = arith.addf %107, %111 : vector<8x256xf32>
    %c0_88 = arith.constant 0 : index
    %c0_89 = arith.constant 0 : index
    %113 = vector.load %arg3[%c0_88, %c0_89] : memref<8x1xf32, #tpu.memory_space<vmem>>, vector<8x1xf32>
    %114 = vector.broadcast %113 : vector<8x1xf32> to vector<8x256xf32>
    %115 = arith.addf %112, %114 : vector<8x256xf32>
    %116 = arith.negf %115 : vector<8x256xf32>
    %117 = math.exp %116 : vector<8x256xf32>
    %cst_90 = arith.constant 1.000000e+00 : f32
    %118 = vector.broadcast %cst_90 : f32 to vector<8x256xf32>
    %119 = arith.addf %118, %117 : vector<8x256xf32>
    %120 = arith.divf %118, %119 : vector<8x256xf32>
    %121 = arith.mulf %115, %120 : vector<8x256xf32>
    %c0_91 = arith.constant 0 : index
    %c0_92 = arith.constant 0 : index
    %122 = vector.load %arg4[%c0_91, %c0_92] : memref<16x8xf32, #tpu.memory_space<vmem>>, vector<16x8xf32>
    %cst_93 = arith.constant dense<0.000000e+00> : vector<16x256xf32>
    %123 = tpu.matmul %122, %121, %cst_93 {dimension_numbers = #tpu.dot_dimension_numbers<[1], [0], [0], [1], [0, 0, 1, 1], [], []>} : vector<16x8xf32>, vector<8x256xf32>, vector<16x256xf32> -> vector<16x256xf32>
    %c0_94 = arith.constant 0 : index
    %c0_95 = arith.constant 0 : index
    %124 = vector.load %arg5[%c0_94, %c0_95] : memref<16x1xf32, #tpu.memory_space<vmem>>, vector<16x1xf32>
    %125 = vector.broadcast %124 : vector<16x1xf32> to vector<16x256xf32>
    %126 = arith.addf %123, %125 : vector<16x256xf32>
    %127 = arith.negf %126 : vector<16x256xf32>
    %128 = math.exp %127 : vector<16x256xf32>
    %cst_96 = arith.constant 1.000000e+00 : f32
    %129 = vector.broadcast %cst_96 : f32 to vector<16x256xf32>
    %130 = arith.addf %129, %128 : vector<16x256xf32>
    %131 = arith.divf %129, %130 : vector<16x256xf32>
    %132 = arith.mulf %126, %131 : vector<16x256xf32>
    %c1_97 = arith.constant 1 : index
    %c0_98 = arith.constant 0 : index
    %c0_99 = arith.constant 0 : index
    %133 = vector.load %arg6[%c1_97, %c0_98, %c0_99] : memref<2x16x256xf32, #tpu.memory_space<vmem>>, vector<1x16x256xf32>
    %134 = vector.shape_cast %133 : vector<1x16x256xf32> to vector<16x256xf32>
    %135 = vector.shape_cast %132 : vector<16x256xf32> to vector<1x16x256xf32>
    tpu.vector_store %arg6[%c1_97, %c0_98, %c0_99], %135 {strides = array<i32>} : memref<2x16x256xf32, #tpu.memory_space<vmem>>, vector<1x16x256xf32>,
    return
  }
  func.func @transform_0(%arg0: i32) -> (i32, i32, i32) {
    %c0_i32 = arith.constant 0 : i32
    %c0_i32_0 = arith.constant 0 : i32
    %c0_i32_1 = arith.constant 0 : i32
    %c0_i32_2 = arith.constant 0 : i32
    return %c0_i32, %c0_i32_0, %c0_i32_1 : i32, i32, i32
  }
  func.func @transform_1(%arg0: i32) -> (i32, i32, i32) {
    %c0_i32 = arith.constant 0 : i32
    %c0_i32_0 = arith.constant 0 : i32
    %c0_i32_1 = arith.constant 0 : i32
    %c0_i32_2 = arith.constant 0 : i32
    return %c0_i32, %c0_i32_0, %c0_i32_1 : i32, i32, i32
  }
  func.func @transform_2(%arg0: i32) -> (i32, i32) {
    %c0_i32 = arith.constant 0 : i32
    %c0_i32_0 = arith.constant 0 : i32
    %c0_i32_1 = arith.constant 0 : i32
    return %c0_i32, %c0_i32_0 : i32, i32
  }
  func.func @transform_3(%arg0: i32) -> (i32, i32) {
    %c0_i32 = arith.constant 0 : i32
    %c0_i32_0 = arith.constant 0 : i32
    %c0_i32_1 = arith.constant 0 : i32
    return %c0_i32, %c0_i32_0 : i32, i32
  }
  func.func @transform_4(%arg0: i32) -> (i32, i32) {
    %c0_i32 = arith.constant 0 : i32
    %c0_i32_0 = arith.constant 0 : i32
    %c0_i32_1 = arith.constant 0 : i32
    return %c0_i32, %c0_i32_0 : i32, i32
  }
  func.func @transform_5(%arg0: i32) -> (i32, i32, i32) {
    %c0_i32 = arith.constant 0 : i32
    %c0_i32_0 = arith.constant 0 : i32
    %c0_i32_1 = arith.constant 0 : i32
    %c0_i32_2 = arith.constant 0 : i32
    return %c0_i32, %c0_i32_0, %c0_i32_1 : i32, i32, i32
  }
}

</mosaic_0001>

<llo_original>
// kernel: test_model_forward.1
$region0: #{test_model_forward.1}
  #allocation0 [shape = 'u32[]', space=smem, size = 0x4, offset = 0x4, fixed_abs, tag = 'smem constant byte address 0x4 - core index']
  #allocation1 [shape = 'u32[144,128]{1,0:T(1,128)}', space=vmem, size = 0x12000, scoped, tag = 'internal scratch']
  %s0 = inlined_call_operand.vmem [shape: f32[2,3,256], index: 0, kind: input, shape index: {}]
  %s1 = inlined_call_operand.vmem [shape: f32[9,8,3], index: 1, kind: input, shape index: {}]
  %s2 = inlined_call_operand.vmem [shape: f32[8,1], index: 2, kind: input, shape index: {}]
  %s3 = inlined_call_operand.vmem [shape: f32[16,8], index: 3, kind: input, shape index: {}]
  %s4 = inlined_call_operand.vmem [shape: f32[16,1], index: 4, kind: input, shape index: {}]
  %s5 = inlined_call_operand.vmem [shape: f32[2,16,256], index: 5, kind: output, shape index: {}]
  %s6 = sld [smem:[#allocation0]]
  $region30: #{test_model_forward.1} parent=0
    _
  %s8 = ssub.s32 1, %s6
  %s9 = scalar_select 0, %s8, %s6
  // Predicated region
  $region2: #{test_model_forward.1} parent=0 // pred_check
    _
  $region3: #{test_model_forward.1} parent=0 // pred_check_branch
    %11 = sbr.rel (0) target = $region5
  $region4: #{test_model_forward.1} parent=0 // pred_region
    _
  $region5: #{test_model_forward.1} parent=0 // pred_fallthru
    _
  // Predicated region
  $region6: #{test_model_forward.1} parent=0 // pred_check
    _
  $region7: #{test_model_forward.1} parent=0 // pred_check_branch
    %13 = sbr.rel (0) target = $region9
  $region8: #{test_model_forward.1} parent=0 // pred_region
    _
  $region9: #{test_model_forward.1} parent=0 // pred_fallthru
    _
  // Predicated region
  $region10: #{test_model_forward.1} parent=0 // pred_check
    _
  $region11: #{test_model_forward.1} parent=0 // pred_check_branch
    %15 = sbr.rel (0) target = $region13
  $region12: #{test_model_forward.1} parent=0 // pred_region
    _
  $region13: #{test_model_forward.1} parent=0 // pred_fallthru
    _
  // Predicated region
  $region14: #{test_model_forward.1} parent=0 // pred_check
    _
  $region15: #{test_model_forward.1} parent=0 // pred_check_branch
    %17 = sbr.rel (0) target = $region17
  $region16: #{test_model_forward.1} parent=0 // pred_region
    _
  $region17: #{test_model_forward.1} parent=0 // pred_fallthru
    _
  // Predicated region
  $region18: #{test_model_forward.1} parent=0 // pred_check
    _
  $region19: #{test_model_forward.1} parent=0 // pred_check_branch
    %19 = sbr.rel (0) target = $region21
  $region20: #{test_model_forward.1} parent=0 // pred_region
    _
  $region21: #{test_model_forward.1} parent=0 // pred_fallthru
    _
  %v20 = vld [vmem:[%s0] sm:$0x77]
  %v21 = vld [vmem:[%s1] sm:$0xff]
  %v23 = vcombine.high %v20, %v20
  %25 = vrot.lane.b32.xlu0 %v20, 127
  %v26 = vpop.permute.xlu0 %25
  %27 = vrot.lane.b32.xlu0 %v23, 127
  %v28 = vpop.permute.xlu0 %27
  %v29 = vlaneseq
  %v30 = vand.u32 %v29, 127
  %vm31 = vcmp.lt.s32.totalorder %v30, 127
  %v32 = vsel %vm31, %v26, %v28
  %v33 = vsel %vm31, %v28, %v26
  %s34 = scalar_lea.vmem %s1, 8
  %v35 = vld [vmem:[%s34] sm:$0xff]
  %vm36 = vcmask 23552
  %v38 = vsel %vm36, %v35, 0
  %vm40 = vcmask 1042432
  %v42 = vsel %vm40, %v32, 0
  %v45 = vsel %vm40, %v33, 0
  %47 = vmatprep.subr.mxu0 %v45
  %48 = vmatpush1.msra.mxu0 %v42
  %49 = vmatprep.subr.mxu0 0.0
  %50 = vmatpush1.msra.mxu0 0.0
  %51 = vmatprep.subr.mxu0 0.0
  %52 = vmatpush1.msra.mxu0 0.0
  %53 = vmatprep.subr.mxu0 0.0
  %54 = vmatpush1.msra.mxu0 0.0
  %55 = vmatprep.subr.mxu0 0.0
  %56 = vmatpush1.msra.mxu0 0.0
  %57 = vmatprep.subr.mxu0 0.0
  %58 = vmatpush1.msra.mxu0 0.0
  %59 = vmatprep.subr.mxu0 0.0
  %60 = vmatpush1.msra.mxu0 0.0
  %61 = vmatprep.subr.mxu0 0.0
  %62 = vmatpush1.msra.mxu0 0.0
  %63 = vmatprep.subr.mxu0 0.0
  %64 = vmatpush1.msra.mxu0 0.0
  %65 = vmatprep.subr.mxu0 0.0
  %66 = vmatpush1.msra.mxu0 0.0
  %67 = vmatprep.subr.mxu0 0.0
  %68 = vmatpush1.msra.mxu0 0.0
  %69 = vmatprep.subr.mxu0 0.0
  %70 = vmatpush1.msra.mxu0 0.0
  %71 = vmatprep.subr.mxu0 0.0
  %72 = vmatpush1.msra.mxu0 0.0
  %73 = vmatprep.subr.mxu0 0.0
  %74 = vmatpush1.msra.mxu0 0.0
  %75 = vmatprep.subr.mxu0 0.0
  %76 = vmatpush1.msra.mxu0 0.0
  %77 = vmatprep.subr.mxu0 0.0
  %78 = vmatpush1.msra.mxu0 0.0
  %79 = vmatprep.subr.mxu0 0.0
  %80 = vmatpush1.msra.mxu0 0.0
  %81 = vmatprep.subr.mxu0 0.0
  %82 = vmatpush1.msra.mxu0 0.0
  %83 = vmatprep.subr.mxu0 0.0
  %84 = vmatpush1.msra.mxu0 0.0
  %85 = vmatprep.subr.mxu0 0.0
  %86 = vmatpush1.msra.mxu0 0.0
  %87 = vmatprep.subr.mxu0 0.0
  %88 = vmatpush1.msra.mxu0 0.0
  %89 = vmatprep.subr.mxu0 0.0
  %90 = vmatpush1.msra.mxu0 0.0
  %91 = vmatprep.subr.mxu0 0.0
  %92 = vmatpush1.msra.mxu0 0.0
  %93 = vmatprep.subr.mxu0 0.0
  %94 = vmatpush1.msra.mxu0 0.0
  %95 = vmatprep.subr.mxu0 0.0
  %96 = vmatpush1.msra.mxu0 0.0
  %97 = vmatprep.subr.mxu0 0.0
  %98 = vmatpush1.msra.mxu0 0.0
  %99 = vmatprep.subr.mxu0 0.0
  %100 = vmatpush1.msra.mxu0 0.0
  %101 = vmatprep.subr.mxu0 0.0
  %102 = vmatpush1.msra.mxu0 0.0
  %103 = vmatprep.subr.mxu0 0.0
  %104 = vmatpush1.msra.mxu0 0.0
  %105 = vmatprep.subr.mxu0 0.0
  %106 = vmatpush1.msra.mxu0 0.0
  %107 = vmatprep.subr.mxu0 0.0
  %108 = vmatpush1.msra.mxu0 0.0
  %109 = vmatprep.subr.mxu0 0.0
  %110 = vmatpush1.msra.mxu0 0.0
  %111 = vmatprep.mubr.f32.mxu0 0.0
  %112 = vmatmul.mubr.f32.gmra.mrb[0].mxu0 %v38
  %v113 = vpop.f32.mrb[0].mxu0
  %v114 = vadd.f32 0.0, %v113
  %v115 = vpop.f32.mrb[0].mxu0
  %v116 = vadd.f32 0.0, %v115
  %117 = vdwg.mxu0
  %v119 = vsel %vm36, %v21, 0
  %v121 = vsel %vm40, %v20, 0
  %v123 = vsel %vm40, %v23, 0
  %125 = vmatprep.subr.mxu0 %v123
  %126 = vmatpush1.msra.mxu0 %v121
  %127 = vmatprep.subr.mxu0 0.0
  %128 = vmatpush1.msra.mxu0 0.0
  %129 = vmatprep.subr.mxu0 0.0
  %130 = vmatpush1.msra.mxu0 0.0
  %131 = vmatprep.subr.mxu0 0.0
  %132 = vmatpush1.msra.mxu0 0.0
  %133 = vmatprep.subr.mxu0 0.0
  %134 = vmatpush1.msra.mxu0 0.0
  %135 = vmatprep.subr.mxu0 0.0
  %136 = vmatpush1.msra.mxu0 0.0
  %137 = vmatprep.subr.mxu0 0.0
  %138 = vmatpush1.msra.mxu0 0.0
  %139 = vmatprep.subr.mxu0 0.0
  %140 = vmatpush1.msra.mxu0 0.0
  %141 = vmatprep.subr.mxu0 0.0
  %142 = vmatpush1.msra.mxu0 0.0
  %143 = vmatprep.subr.mxu0 0.0
  %144 = vmatpush1.msra.mxu0 0.0
  %145 = vmatprep.subr.mxu0 0.0
  %146 = vmatpush1.msra.mxu0 0.0
  %147 = vmatprep.subr.mxu0 0.0
  %148 = vmatpush1.msra.mxu0 0.0
  %149 = vmatprep.subr.mxu0 0.0
  %150 = vmatpush1.msra.mxu0 0.0
  %151 = vmatprep.subr.mxu0 0.0
  %152 = vmatpush1.msra.mxu0 0.0
  %153 = vmatprep.subr.mxu0 0.0
  %154 = vmatpush1.msra.mxu0 0.0
  %155 = vmatprep.subr.mxu0 0.0
  %156 = vmatpush1.msra.mxu0 0.0
  %157 = vmatprep.subr.mxu0 0.0
  %158 = vmatpush1.msra.mxu0 0.0
  %159 = vmatprep.subr.mxu0 0.0
  %160 = vmatpush1.msra.mxu0 0.0
  %161 = vmatprep.subr.mxu0 0.0
  %162 = vmatpush1.msra.mxu0 0.0
  %163 = vmatprep.subr.mxu0 0.0
  %164 = vmatpush1.msra.mxu0 0.0
  %165 = vmatprep.subr.mxu0 0.0
  %166 = vmatpush1.msra.mxu0 0.0
  %167 = vmatprep.subr.mxu0 0.0
  %168 = vmatpush1.msra.mxu0 0.0
  %169 = vmatprep.subr.mxu0 0.0
  %170 = vmatpush1.msra.mxu0 0.0
  %171 = vmatprep.subr.mxu0 0.0
  %172 = vmatpush1.msra.mxu0 0.0
  %173 = vmatprep.subr.mxu0 0.0
  %174 = vmatpush1.msra.mxu0 0.0
  %175 = vmatprep.subr.mxu0 0.0
  %176 = vmatpush1.msra.mxu0 0.0
  %177 = vmatprep.subr.mxu0 0.0
  %178 = vmatpush1.msra.mxu0 0.0
  %179 = vmatprep.subr.mxu0 0.0
  %180 = vmatpush1.msra.mxu0 0.0
  %181 = vmatprep.subr.mxu0 0.0
  %182 = vmatpush1.msra.mxu0 0.0
  %183 = vmatprep.subr.mxu0 0.0
  %184 = vmatpush1.msra.mxu0 0.0
  %185 = vmatprep.subr.mxu0 0.0
  %186 = vmatpush1.msra.mxu0 0.0
  %187 = vmatprep.subr.mxu0 0.0
  %188 = vmatpush1.msra.mxu0 0.0
  %189 = vmatprep.mubr.f32.mxu0 0.0
  %190 = vmatmul.mubr.f32.gmra.mrb[0].mxu0 %v119
  %v191 = vpop.f32.mrb[0].mxu0
  %v192 = vadd.f32 %v114, %v191
  %v193 = vpop.f32.mrb[0].mxu0
  %v194 = vadd.f32 %v116, %v193
  %195 = vdwg.mxu0
  %196 = vrot.lane.b32.xlu0 %v20, 126
  %v197 = vpop.permute.xlu0 %196
  %198 = vrot.lane.b32.xlu0 %v23, 126
  %v199 = vpop.permute.xlu0 %198
  %vm200 = vcmp.lt.s32.totalorder %v30, 126
  %v201 = vsel %vm200, %v197, %v199
  %v202 = vsel %vm200, %v199, %v197
  %s203 = scalar_lea.vmem %s1, 16
  %v204 = vld [vmem:[%s203] sm:$0xff]
  %v206 = vsel %vm36, %v204, 0
  %v209 = vsel %vm40, %v201, 0
  %v212 = vsel %vm40, %v202, 0
  %214 = vmatprep.subr.mxu0 %v212
  %215 = vmatpush1.msra.mxu0 %v209
  %216 = vmatprep.subr.mxu0 0.0
  %217 = vmatpush1.msra.mxu0 0.0
  %218 = vmatprep.subr.mxu0 0.0
  %219 = vmatpush1.msra.mxu0 0.0
  %220 = vmatprep.subr.mxu0 0.0
  %221 = vmatpush1.msra.mxu0 0.0
  %222 = vmatprep.subr.mxu0 0.0
  %223 = vmatpush1.msra.mxu0 0.0
  %224 = vmatprep.subr.mxu0 0.0
  %225 = vmatpush1.msra.mxu0 0.0
  %226 = vmatprep.subr.mxu0 0.0
  %227 = vmatpush1.msra.mxu0 0.0
  %228 = vmatprep.subr.mxu0 0.0
  %229 = vmatpush1.msra.mxu0 0.0
  %230 = vmatprep.subr.mxu0 0.0
  %231 = vmatpush1.msra.mxu0 0.0
  %232 = vmatprep.subr.mxu0 0.0
  %233 = vmatpush1.msra.mxu0 0.0
  %234 = vmatprep.subr.mxu0 0.0
  %235 = vmatpush1.msra.mxu0 0.0
  %236 = vmatprep.subr.mxu0 0.0
  %237 = vmatpush1.msra.mxu0 0.0
  %238 = vmatprep.subr.mxu0 0.0
  %239 = vmatpush1.msra.mxu0 0.0
  %240 = vmatprep.subr.mxu0 0.0
  %241 = vmatpush1.msra.mxu0 0.0
  %242 = vmatprep.subr.mxu0 0.0
  %243 = vmatpush1.msra.mxu0 0.0
  %244 = vmatprep.subr.mxu0 0.0
  %245 = vmatpush1.msra.mxu0 0.0
  %246 = vmatprep.subr.mxu0 0.0
  %247 = vmatpush1.msra.mxu0 0.0
  %248 = vmatprep.subr.mxu0 0.0
  %249 = vmatpush1.msra.mxu0 0.0
  %250 = vmatprep.subr.mxu0 0.0
  %251 = vmatpush1.msra.mxu0 0.0
  %252 = vmatprep.subr.mxu0 0.0
  %253 = vmatpush1.msra.mxu0 0.0
  %254 = vmatprep.subr.mxu0 0.0
  %255 = vmatpush1.msra.mxu0 0.0
  %256 = vmatprep.subr.mxu0 0.0
  %257 = vmatpush1.msra.mxu0 0.0
  %258 = vmatprep.subr.mxu0 0.0
  %259 = vmatpush1.msra.mxu0 0.0
  %260 = vmatprep.subr.mxu0 0.0
  %261 = vmatpush1.msra.mxu0 0.0
  %262 = vmatprep.subr.mxu0 0.0
  %263 = vmatpush1.msra.mxu0 0.0
  %264 = vmatprep.subr.mxu0 0.0
  %265 = vmatpush1.msra.mxu0 0.0
  %266 = vmatprep.subr.mxu0 0.0
  %267 = vmatpush1.msra.mxu0 0.0
  %268 = vmatprep.subr.mxu0 0.0
  %269 = vmatpush1.msra.mxu0 0.0
  %270 = vmatprep.subr.mxu0 0.0
  %271 = vmatpush1.msra.mxu0 0.0
  %272 = vmatprep.subr.mxu0 0.0
  %273 = vmatpush1.msra.mxu0 0.0
  %274 = vmatprep.subr.mxu0 0.0
  %275 = vmatpush1.msra.mxu0 0.0
  %276 = vmatprep.subr.mxu0 0.0
  %277 = vmatpush1.msra.mxu0 0.0
  %278 = vmatprep.mubr.f32.mxu0 0.0
  %279 = vmatmul.mubr.f32.gmra.mrb[0].mxu0 %v206
  %v280 = vpop.f32.mrb[0].mxu0
  %v281 = vadd.f32 0.0, %v280
  %v282 = vpop.f32.mrb[0].mxu0
  %v283 = vadd.f32 0.0, %v282
  %284 = vdwg.mxu0
  %v285 = vadd.f32 %v192, %v281
  %v286 = vadd.f32 %v194, %v283
  %287 = vrot.lane.b32.xlu0 %v20, 112
  %v288 = vpop.permute.xlu0 %287
  %289 = vrot.lane.b32.xlu0 %v23, 112
  %v290 = vpop.permute.xlu0 %289
  %vm291 = vcmp.lt.s32.totalorder %v30, 112
  %v292 = vsel %vm291, %v288, %v290
  %v293 = vsel %vm291, %v290, %v288
  %s294 = scalar_lea.vmem %s1, 24
  %v295 = vld [vmem:[%s294] sm:$0xff]
  %v297 = vsel %vm36, %v295, 0
  %v300 = vsel %vm40, %v292, 0
  %v303 = vsel %vm40, %v293, 0
  %305 = vmatprep.subr.mxu0 %v303
  %306 = vmatpush1.msra.mxu0 %v300
  %307 = vmatprep.subr.mxu0 0.0
  %308 = vmatpush1.msra.mxu0 0.0
  %309 = vmatprep.subr.mxu0 0.0
  %310 = vmatpush1.msra.mxu0 0.0
  %311 = vmatprep.subr.mxu0 0.0
  %312 = vmatpush1.msra.mxu0 0.0
  %313 = vmatprep.subr.mxu0 0.0
  %314 = vmatpush1.msra.mxu0 0.0
  %315 = vmatprep.subr.mxu0 0.0
  %316 = vmatpush1.msra.mxu0 0.0
  %317 = vmatprep.subr.mxu0 0.0
  %318 = vmatpush1.msra.mxu0 0.0
  %319 = vmatprep.subr.mxu0 0.0
  %320 = vmatpush1.msra.mxu0 0.0
  %321 = vmatprep.subr.mxu0 0.0
  %322 = vmatpush1.msra.mxu0 0.0
  %323 = vmatprep.subr.mxu0 0.0
  %324 = vmatpush1.msra.mxu0 0.0
  %325 = vmatprep.subr.mxu0 0.0
  %326 = vmatpush1.msra.mxu0 0.0
  %327 = vmatprep.subr.mxu0 0.0
  %328 = vmatpush1.msra.mxu0 0.0
  %329 = vmatprep.subr.mxu0 0.0
  %330 = vmatpush1.msra.mxu0 0.0
  %331 = vmatprep.subr.mxu0 0.0
  %332 = vmatpush1.msra.mxu0 0.0
  %333 = vmatprep.subr.mxu0 0.0
  %334 = vmatpush1.msra.mxu0 0.0
  %335 = vmatprep.subr.mxu0 0.0
  %336 = vmatpush1.msra.mxu0 0.0
  %337 = vmatprep.subr.mxu0 0.0
  %338 = vmatpush1.msra.mxu0 0.0
  %339 = vmatprep.subr.mxu0 0.0
  %340 = vmatpush1.msra.mxu0 0.0
  %341 = vmatprep.subr.mxu0 0.0
  %342 = vmatpush1.msra.mxu0 0.0
  %343 = vmatprep.subr.mxu0 0.0
  %344 = vmatpush1.msra.mxu0 0.0
  %345 = vmatprep.subr.mxu0 0.0
  %346 = vmatpush1.msra.mxu0 0.0
  %347 = vmatprep.subr.mxu0 0.0
  %348 = vmatpush1.msra.mxu0 0.0
  %349 = vmatprep.subr.mxu0 0.0
  %350 = vmatpush1.msra.mxu0 0.0
  %351 = vmatprep.subr.mxu0 0.0
  %352 = vmatpush1.msra.mxu0 0.0
  %353 = vmatprep.subr.mxu0 0.0
  %354 = vmatpush1.msra.mxu0 0.0
  %355 = vmatprep.subr.mxu0 0.0
  %356 = vmatpush1.msra.mxu0 0.0
  %357 = vmatprep.subr.mxu0 0.0
  %358 = vmatpush1.msra.mxu0 0.0
  %359 = vmatprep.subr.mxu0 0.0
  %360 = vmatpush1.msra.mxu0 0.0
  %361 = vmatprep.subr.mxu0 0.0
  %362 = vmatpush1.msra.mxu0 0.0
  %363 = vmatprep.subr.mxu0 0.0
  %364 = vmatpush1.msra.mxu0 0.0
  %365 = vmatprep.subr.mxu0 0.0
  %366 = vmatpush1.msra.mxu0 0.0
  %367 = vmatprep.subr.mxu0 0.0
  %368 = vmatpush1.msra.mxu0 0.0
  %369 = vmatprep.mubr.f32.mxu0 0.0
  %370 = vmatmul.mubr.f32.gmra.mrb[0].mxu0 %v297
  %v371 = vpop.f32.mrb[0].mxu0
  %v372 = vadd.f32 0.0, %v371
  %v373 = vpop.f32.mrb[0].mxu0
  %v374 = vadd.f32 0.0, %v373
  %375 = vdwg.mxu0
  %v376 = vadd.f32 %v285, %v372
  %v377 = vadd.f32 %v286, %v374
  %378 = vrot.lane.b32.xlu0 %v20, 111
  %v379 = vpop.permute.xlu0 %378
  %380 = vrot.lane.b32.xlu0 %v23, 111
  %v381 = vpop.permute.xlu0 %380
  %vm382 = vcmp.lt.s32.totalorder %v30, 111
  %v383 = vsel %vm382, %v379, %v381
  %v384 = vsel %vm382, %v381, %v379
  %s385 = scalar_lea.vmem %s1, 32
  %v386 = vld [vmem:[%s385] sm:$0xff]
  %v388 = vsel %vm36, %v386, 0
  %v391 = vsel %vm40, %v383, 0
  %v394 = vsel %vm40, %v384, 0
  %396 = vmatprep.subr.mxu0 %v394
  %397 = vmatpush1.msra.mxu0 %v391
  %398 = vmatprep.subr.mxu0 0.0
  %399 = vmatpush1.msra.mxu0 0.0
  %400 = vmatprep.subr.mxu0 0.0
  %401 = vmatpush1.msra.mxu0 0.0
  %402 = vmatprep.subr.mxu0 0.0
  %403 = vmatpush1.msra.mxu0 0.0
  %404 = vmatprep.subr.mxu0 0.0
  %405 = vmatpush1.msra.mxu0 0.0
  %406 = vmatprep.subr.mxu0 0.0
  %407 = vmatpush1.msra.mxu0 0.0
  %408 = vmatprep.subr.mxu0 0.0
  %409 = vmatpush1.msra.mxu0 0.0
  %410 = vmatprep.subr.mxu0 0.0
  %411 = vmatpush1.msra.mxu0 0.0
  %412 = vmatprep.subr.mxu0 0.0
  %413 = vmatpush1.msra.mxu0 0.0
  %414 = vmatprep.subr.mxu0 0.0
  %415 = vmatpush1.msra.mxu0 0.0
  %416 = vmatprep.subr.mxu0 0.0
  %417 = vmatpush1.msra.mxu0 0.0
  %418 = vmatprep.subr.mxu0 0.0
  %419 = vmatpush1.msra.mxu0 0.0
  %420 = vmatprep.subr.mxu0 0.0
  %421 = vmatpush1.msra.mxu0 0.0
  %422 = vmatprep.subr.mxu0 0.0
  %423 = vmatpush1.msra.mxu0 0.0
  %424 = vmatprep.subr.mxu0 0.0
  %425 = vmatpush1.msra.mxu0 0.0
  %426 = vmatprep.subr.mxu0 0.0
  %427 = vmatpush1.msra.mxu0 0.0
  %428 = vmatprep.subr.mxu0 0.0
  %429 = vmatpush1.msra.mxu0 0.0
  %430 = vmatprep.subr.mxu0 0.0
  %431 = vmatpush1.msra.mxu0 0.0
  %432 = vmatprep.subr.mxu0 0.0
  %433 = vmatpush1.msra.mxu0 0.0
  %434 = vmatprep.subr.mxu0 0.0
  %435 = vmatpush1.msra.mxu0 0.0
  %436 = vmatprep.subr.mxu0 0.0
  %437 = vmatpush1.msra.mxu0 0.0
  %438 = vmatprep.subr.mxu0 0.0
  %439 = vmatpush1.msra.mxu0 0.0
  %440 = vmatprep.subr.mxu0 0.0
  %441 = vmatpush1.msra.mxu0 0.0
  %442 = vmatprep.subr.mxu0 0.0
  %443 = vmatpush1.msra.mxu0 0.0
  %444 = vmatprep.subr.mxu0 0.0
  %445 = vmatpush1.msra.mxu0 0.0
  %446 = vmatprep.subr.mxu0 0.0
  %447 = vmatpush1.msra.mxu0 0.0
  %448 = vmatprep.subr.mxu0 0.0
  %449 = vmatpush1.msra.mxu0 0.0
  %450 = vmatprep.subr.mxu0 0.0
  %451 = vmatpush1.msra.mxu0 0.0
  %452 = vmatprep.subr.mxu0 0.0
  %453 = vmatpush1.msra.mxu0 0.0
  %454 = vmatprep.subr.mxu0 0.0
  %455 = vmatpush1.msra.mxu0 0.0
  %456 = vmatprep.subr.mxu0 0.0
  %457 = vmatpush1.msra.mxu0 0.0
  %458 = vmatprep.subr.mxu0 0.0
  %459 = vmatpush1.msra.mxu0 0.0
  %460 = vmatprep.mubr.f32.mxu0 0.0
  %461 = vmatmul.mubr.f32.gmra.mrb[0].mxu0 %v388
  %v462 = vpop.f32.mrb[0].mxu0
  %v463 = vadd.f32 0.0, %v462
  %v464 = vpop.f32.mrb[0].mxu0
  %v465 = vadd.f32 0.0, %v464
  %466 = vdwg.mxu0
  %v467 = vadd.f32 %v376, %v463
  %v468 = vadd.f32 %v377, %v465
  %469 = vrot.lane.b32.xlu0 %v20, 110
  %v470 = vpop.permute.xlu0 %469
  %471 = vrot.lane.b32.xlu0 %v23, 110
  %v472 = vpop.permute.xlu0 %471
  %vm473 = vcmp.lt.s32.totalorder %v30, 110
  %v474 = vsel %vm473, %v470, %v472
  %v475 = vsel %vm473, %v472, %v470
  %s476 = scalar_lea.vmem %s1, 40
  %v477 = vld [vmem:[%s476] sm:$0xff]
  %v479 = vsel %vm36, %v477, 0
  %v482 = vsel %vm40, %v474, 0
  %v485 = vsel %vm40, %v475, 0
  %487 = vmatprep.subr.mxu0 %v485
  %488 = vmatpush1.msra.mxu0 %v482
  %489 = vmatprep.subr.mxu0 0.0
  %490 = vmatpush1.msra.mxu0 0.0
  %491 = vmatprep.subr.mxu0 0.0
  %492 = vmatpush1.msra.mxu0 0.0
  %493 = vmatprep.subr.mxu0 0.0
  %494 = vmatpush1.msra.mxu0 0.0
  %495 = vmatprep.subr.mxu0 0.0
  %496 = vmatpush1.msra.mxu0 0.0
  %497 = vmatprep.subr.mxu0 0.0
  %498 = vmatpush1.msra.mxu0 0.0
  %499 = vmatprep.subr.mxu0 0.0
  %500 = vmatpush1.msra.mxu0 0.0
  %501 = vmatprep.subr.mxu0 0.0
  %502 = vmatpush1.msra.mxu0 0.0
  %503 = vmatprep.subr.mxu0 0.0
  %504 = vmatpush1.msra.mxu0 0.0
  %505 = vmatprep.subr.mxu0 0.0
  %506 = vmatpush1.msra.mxu0 0.0
  %507 = vmatprep.subr.mxu0 0.0
  %508 = vmatpush1.msra.mxu0 0.0
  %509 = vmatprep.subr.mxu0 0.0
  %510 = vmatpush1.msra.mxu0 0.0
  %511 = vmatprep.subr.mxu0 0.0
  %512 = vmatpush1.msra.mxu0 0.0
  %513 = vmatprep.subr.mxu0 0.0
  %514 = vmatpush1.msra.mxu0 0.0
  %515 = vmatprep.subr.mxu0 0.0
  %516 = vmatpush1.msra.mxu0 0.0
  %517 = vmatprep.subr.mxu0 0.0
  %518 = vmatpush1.msra.mxu0 0.0
  %519 = vmatprep.subr.mxu0 0.0
  %520 = vmatpush1.msra.mxu0 0.0
  %521 = vmatprep.subr.mxu0 0.0
  %522 = vmatpush1.msra.mxu0 0.0
  %523 = vmatprep.subr.mxu0 0.0
  %524 = vmatpush1.msra.mxu0 0.0
  %525 = vmatprep.subr.mxu0 0.0
  %526 = vmatpush1.msra.mxu0 0.0
  %527 = vmatprep.subr.mxu0 0.0
  %528 = vmatpush1.msra.mxu0 0.0
  %529 = vmatprep.subr.mxu0 0.0
  %530 = vmatpush1.msra.mxu0 0.0
  %531 = vmatprep.subr.mxu0 0.0
  %532 = vmatpush1.msra.mxu0 0.0
  %533 = vmatprep.subr.mxu0 0.0
  %534 = vmatpush1.msra.mxu0 0.0
  %535 = vmatprep.subr.mxu0 0.0
  %536 = vmatpush1.msra.mxu0 0.0
  %537 = vmatprep.subr.mxu0 0.0
  %538 = vmatpush1.msra.mxu0 0.0
  %539 = vmatprep.subr.mxu0 0.0
  %540 = vmatpush1.msra.mxu0 0.0
  %541 = vmatprep.subr.mxu0 0.0
  %542 = vmatpush1.msra.mxu0 0.0
  %543 = vmatprep.subr.mxu0 0.0
  %544 = vmatpush1.msra.mxu0 0.0
  %545 = vmatprep.subr.mxu0 0.0
  %546 = vmatpush1.msra.mxu0 0.0
  %547 = vmatprep.subr.mxu0 0.0
  %548 = vmatpush1.msra.mxu0 0.0
  %549 = vmatprep.subr.mxu0 0.0
  %550 = vmatpush1.msra.mxu0 0.0
  %551 = vmatprep.mubr.f32.mxu0 0.0
  %552 = vmatmul.mubr.f32.gmra.mrb[0].mxu0 %v479
  %v553 = vpop.f32.mrb[0].mxu0
  %v554 = vadd.f32 0.0, %v553
  %v555 = vpop.f32.mrb[0].mxu0
  %v556 = vadd.f32 0.0, %v555
  %557 = vdwg.mxu0
  %v558 = vadd.f32 %v467, %v554
  %v559 = vadd.f32 %v468, %v556
  %560 = vrot.lane.b32.xlu0 %v20, 96
  %v561 = vpop.permute.xlu0 %560
  %562 = vrot.lane.b32.xlu0 %v23, 96
  %v563 = vpop.permute.xlu0 %562
  %vm564 = vcmp.lt.s32.totalorder %v30, 96
  %v565 = vsel %vm564, %v561, %v563
  %v566 = vsel %vm564, %v563, %v561
  %s567 = scalar_lea.vmem %s1, 48
  %v568 = vld [vmem:[%s567] sm:$0xff]
  %v570 = vsel %vm36, %v568, 0
  %v573 = vsel %vm40, %v565, 0
  %v576 = vsel %vm40, %v566, 0
  %578 = vmatprep.subr.mxu0 %v576
  %579 = vmatpush1.msra.mxu0 %v573
  %580 = vmatprep.subr.mxu0 0.0
  %581 = vmatpush1.msra.mxu0 0.0
  %582 = vmatprep.subr.mxu0 0.0
  %583 = vmatpush1.msra.mxu0 0.0
  %584 = vmatprep.subr.mxu0 0.0
  %585 = vmatpush1.msra.mxu0 0.0
  %586 = vmatprep.subr.mxu0 0.0
  %587 = vmatpush1.msra.mxu0 0.0
  %588 = vmatprep.subr.mxu0 0.0
  %589 = vmatpush1.msra.mxu0 0.0
  %590 = vmatprep.subr.mxu0 0.0
  %591 = vmatpush1.msra.mxu0 0.0
  %592 = vmatprep.subr.mxu0 0.0
  %593 = vmatpush1.msra.mxu0 0.0
  %594 = vmatprep.subr.mxu0 0.0
  %595 = vmatpush1.msra.mxu0 0.0
  %596 = vmatprep.subr.mxu0 0.0
  %597 = vmatpush1.msra.mxu0 0.0
  %598 = vmatprep.subr.mxu0 0.0
  %599 = vmatpush1.msra.mxu0 0.0
  %600 = vmatprep.subr.mxu0 0.0
  %601 = vmatpush1.msra.mxu0 0.0
  %602 = vmatprep.subr.mxu0 0.0
  %603 = vmatpush1.msra.mxu0 0.0
  %604 = vmatprep.subr.mxu0 0.0
  %605 = vmatpush1.msra.mxu0 0.0
  %606 = vmatprep.subr.mxu0 0.0
  %607 = vmatpush1.msra.mxu0 0.0
  %608 = vmatprep.subr.mxu0 0.0
  %609 = vmatpush1.msra.mxu0 0.0
  %610 = vmatprep.subr.mxu0 0.0
  %611 = vmatpush1.msra.mxu0 0.0
  %612 = vmatprep.subr.mxu0 0.0
  %613 = vmatpush1.msra.mxu0 0.0
  %614 = vmatprep.subr.mxu0 0.0
  %615 = vmatpush1.msra.mxu0 0.0
  %616 = vmatprep.subr.mxu0 0.0
  %617 = vmatpush1.msra.mxu0 0.0
  %618 = vmatprep.subr.mxu0 0.0
  %619 = vmatpush1.msra.mxu0 0.0
  %620 = vmatprep.subr.mxu0 0.0
  %621 = vmatpush1.msra.mxu0 0.0
  %622 = vmatprep.subr.mxu0 0.0
  %623 = vmatpush1.msra.mxu0 0.0
  %624 = vmatprep.subr.mxu0 0.0
  %625 = vmatpush1.msra.mxu0 0.0
  %626 = vmatprep.subr.mxu0 0.0
  %627 = vmatpush1.msra.mxu0 0.0
  %628 = vmatprep.subr.mxu0 0.0
  %629 = vmatpush1.msra.mxu0 0.0
  %630 = vmatprep.subr.mxu0 0.0
  %631 = vmatpush1.msra.mxu0 0.0
  %632 = vmatprep.subr.mxu0 0.0
  %633 = vmatpush1.msra.mxu0 0.0
  %634 = vmatprep.subr.mxu0 0.0
  %635 = vmatpush1.msra.mxu0 0.0
  %636 = vmatprep.subr.mxu0 0.0
  %637 = vmatpush1.msra.mxu0 0.0
  %638 = vmatprep.subr.mxu0 0.0
  %639 = vmatpush1.msra.mxu0 0.0
  %640 = vmatprep.subr.mxu0 0.0
  %641 = vmatpush1.msra.mxu0 0.0
  %642 = vmatprep.mubr.f32.mxu0 0.0
  %643 = vmatmul.mubr.f32.gmra.mrb[0].mxu0 %v570
  %v644 = vpop.f32.mrb[0].mxu0
  %v645 = vadd.f32 0.0, %v644
  %v646 = vpop.f32.mrb[0].mxu0
  %v647 = vadd.f32 0.0, %v646
  %648 = vdwg.mxu0
  %v649 = vadd.f32 %v558, %v645
  %v650 = vadd.f32 %v559, %v647
  %651 = vrot.lane.b32.xlu0 %v20, 95
  %v652 = vpop.permute.xlu0 %651
  %653 = vrot.lane.b32.xlu0 %v23, 95
  %v654 = vpop.permute.xlu0 %653
  %vm655 = vcmp.lt.s32.totalorder %v30, 95
  %v656 = vsel %vm655, %v652, %v654
  %v657 = vsel %vm655, %v654, %v652
  %s658 = scalar_lea.vmem %s1, 56
  %v659 = vld [vmem:[%s658] sm:$0xff]
  %v661 = vsel %vm36, %v659, 0
  %v664 = vsel %vm40, %v656, 0
  %v667 = vsel %vm40, %v657, 0
  %669 = vmatprep.subr.mxu0 %v667
  %670 = vmatpush1.msra.mxu0 %v664
  %671 = vmatprep.subr.mxu0 0.0
  %672 = vmatpush1.msra.mxu0 0.0
  %673 = vmatprep.subr.mxu0 0.0
  %674 = vmatpush1.msra.mxu0 0.0
  %675 = vmatprep.subr.mxu0 0.0
  %676 = vmatpush1.msra.mxu0 0.0
  %677 = vmatprep.subr.mxu0 0.0
  %678 = vmatpush1.msra.mxu0 0.0
  %679 = vmatprep.subr.mxu0 0.0
  %680 = vmatpush1.msra.mxu0 0.0
  %681 = vmatprep.subr.mxu0 0.0
  %682 = vmatpush1.msra.mxu0 0.0
  %683 = vmatprep.subr.mxu0 0.0
  %684 = vmatpush1.msra.mxu0 0.0
  %685 = vmatprep.subr.mxu0 0.0
  %686 = vmatpush1.msra.mxu0 0.0
  %687 = vmatprep.subr.mxu0 0.0
  %688 = vmatpush1.msra.mxu0 0.0
  %689 = vmatprep.subr.mxu0 0.0
  %690 = vmatpush1.msra.mxu0 0.0
  %691 = vmatprep.subr.mxu0 0.0
  %692 = vmatpush1.msra.mxu0 0.0
  %693 = vmatprep.subr.mxu0 0.0
  %694 = vmatpush1.msra.mxu0 0.0
  %695 = vmatprep.subr.mxu0 0.0
  %696 = vmatpush1.msra.mxu0 0.0
  %697 = vmatprep.subr.mxu0 0.0
  %698 = vmatpush1.msra.mxu0 0.0
  %699 = vmatprep.subr.mxu0 0.0
  %700 = vmatpush1.msra.mxu0 0.0
  %701 = vmatprep.subr.mxu0 0.0
  %702 = vmatpush1.msra.mxu0 0.0
  %703 = vmatprep.subr.mxu0 0.0
  %704 = vmatpush1.msra.mxu0 0.0
  %705 = vmatprep.subr.mxu0 0.0
  %706 = vmatpush1.msra.mxu0 0.0
  %707 = vmatprep.subr.mxu0 0.0
  %708 = vmatpush1.msra.mxu0 0.0
  %709 = vmatprep.subr.mxu0 0.0
  %710 = vmatpush1.msra.mxu0 0.0
  %711 = vmatprep.subr.mxu0 0.0
  %712 = vmatpush1.msra.mxu0 0.0
  %713 = vmatprep.subr.mxu0 0.0
  %714 = vmatpush1.msra.mxu0 0.0
  %715 = vmatprep.subr.mxu0 0.0
  %716 = vmatpush1.msra.mxu0 0.0
  %717 = vmatprep.subr.mxu0 0.0
  %718 = vmatpush1.msra.mxu0 0.0
  %719 = vmatprep.subr.mxu0 0.0
  %720 = vmatpush1.msra.mxu0 0.0
  %721 = vmatprep.subr.mxu0 0.0
  %722 = vmatpush1.msra.mxu0 0.0
  %723 = vmatprep.subr.mxu0 0.0
  %724 = vmatpush1.msra.mxu0 0.0
  %725 = vmatprep.subr.mxu0 0.0
  %726 = vmatpush1.msra.mxu0 0.0
  %727 = vmatprep.subr.mxu0 0.0
  %728 = vmatpush1.msra.mxu0 0.0
  %729 = vmatprep.subr.mxu0 0.0
  %730 = vmatpush1.msra.mxu0 0.0
  %731 = vmatprep.subr.mxu0 0.0
  %732 = vmatpush1.msra.mxu0 0.0
  %733 = vmatprep.mubr.f32.mxu0 0.0
  %734 = vmatmul.mubr.f32.gmra.mrb[0].mxu0 %v661
  %v735 = vpop.f32.mrb[0].mxu0
  %v736 = vadd.f32 0.0, %v735
  %v737 = vpop.f32.mrb[0].mxu0
  %v738 = vadd.f32 0.0, %v737
  %739 = vdwg.mxu0
  %v740 = vadd.f32 %v649, %v736
  %v741 = vadd.f32 %v650, %v738
  %742 = vrot.lane.b32.xlu0 %v20, 94
  %v743 = vpop.permute.xlu0 %742
  %744 = vrot.lane.b32.xlu0 %v23, 94
  %v745 = vpop.permute.xlu0 %744
  %vm746 = vcmp.lt.s32.totalorder %v30, 94
  %v747 = vsel %vm746, %v743, %v745
  %v748 = vsel %vm746, %v745, %v743
  %s749 = scalar_lea.vmem %s1, 64
  %v750 = vld [vmem:[%s749] sm:$0xff]
  %v752 = vsel %vm36, %v750, 0
  %v755 = vsel %vm40, %v747, 0
  %v758 = vsel %vm40, %v748, 0
  %760 = vmatprep.subr.mxu0 %v758
  %761 = vmatpush1.msra.mxu0 %v755
  %762 = vmatprep.subr.mxu0 0.0
  %763 = vmatpush1.msra.mxu0 0.0
  %764 = vmatprep.subr.mxu0 0.0
  %765 = vmatpush1.msra.mxu0 0.0
  %766 = vmatprep.subr.mxu0 0.0
  %767 = vmatpush1.msra.mxu0 0.0
  %768 = vmatprep.subr.mxu0 0.0
  %769 = vmatpush1.msra.mxu0 0.0
  %770 = vmatprep.subr.mxu0 0.0
  %771 = vmatpush1.msra.mxu0 0.0
  %772 = vmatprep.subr.mxu0 0.0
  %773 = vmatpush1.msra.mxu0 0.0
  %774 = vmatprep.subr.mxu0 0.0
  %775 = vmatpush1.msra.mxu0 0.0
  %776 = vmatprep.subr.mxu0 0.0
  %777 = vmatpush1.msra.mxu0 0.0
  %778 = vmatprep.subr.mxu0 0.0
  %779 = vmatpush1.msra.mxu0 0.0
  %780 = vmatprep.subr.mxu0 0.0
  %781 = vmatpush1.msra.mxu0 0.0
  %782 = vmatprep.subr.mxu0 0.0
  %783 = vmatpush1.msra.mxu0 0.0
  %784 = vmatprep.subr.mxu0 0.0
  %785 = vmatpush1.msra.mxu0 0.0
  %786 = vmatprep.subr.mxu0 0.0
  %787 = vmatpush1.msra.mxu0 0.0
  %788 = vmatprep.subr.mxu0 0.0
  %789 = vmatpush1.msra.mxu0 0.0
  %790 = vmatprep.subr.mxu0 0.0
  %791 = vmatpush1.msra.mxu0 0.0
  %792 = vmatprep.subr.mxu0 0.0
  %793 = vmatpush1.msra.mxu0 0.0
  %794 = vmatprep.subr.mxu0 0.0
  %795 = vmatpush1.msra.mxu0 0.0
  %796 = vmatprep.subr.mxu0 0.0
  %797 = vmatpush1.msra.mxu0 0.0
  %798 = vmatprep.subr.mxu0 0.0
  %799 = vmatpush1.msra.mxu0 0.0
  %800 = vmatprep.subr.mxu0 0.0
  %801 = vmatpush1.msra.mxu0 0.0
  %802 = vmatprep.subr.mxu0 0.0
  %803 = vmatpush1.msra.mxu0 0.0
  %804 = vmatprep.subr.mxu0 0.0
  %805 = vmatpush1.msra.mxu0 0.0
  %806 = vmatprep.subr.mxu0 0.0
  %807 = vmatpush1.msra.mxu0 0.0
  %808 = vmatprep.subr.mxu0 0.0
  %809 = vmatpush1.msra.mxu0 0.0
  %810 = vmatprep.subr.mxu0 0.0
  %811 = vmatpush1.msra.mxu0 0.0
  %812 = vmatprep.subr.mxu0 0.0
  %813 = vmatpush1.msra.mxu0 0.0
  %814 = vmatprep.subr.mxu0 0.0
  %815 = vmatpush1.msra.mxu0 0.0
  %816 = vmatprep.subr.mxu0 0.0
  %817 = vmatpush1.msra.mxu0 0.0
  %818 = vmatprep.subr.mxu0 0.0
  %819 = vmatpush1.msra.mxu0 0.0
  %820 = vmatprep.subr.mxu0 0.0
  %821 = vmatpush1.msra.mxu0 0.0
  %822 = vmatprep.subr.mxu0 0.0
  %823 = vmatpush1.msra.mxu0 0.0
  %824 = vmatprep.mubr.f32.mxu0 0.0
  %825 = vmatmul.mubr.f32.gmra.mrb[0].mxu0 %v752
  %v826 = vpop.f32.mrb[0].mxu0
  %v827 = vadd.f32 0.0, %v826
  %v828 = vpop.f32.mrb[0].mxu0
  %v829 = vadd.f32 0.0, %v828
  %830 = vdwg.mxu0
  %v831 = vadd.f32 %v740, %v827
  %v832 = vadd.f32 %v741, %v829
  %v833 = vld [vmem:[%s2] sm:$0xff]
  %835 = vset.pattern.permute.xlu0 0
  %836 = vperm.xlu0 %835, %v833
  %v837 = vpop.permute.xlu0 %836
  %v839 = vadd.f32 %v831, %v837
  %v840 = vadd.f32 %v832, %v837
  %v841 = vxor.u32 %v839, 2147483648
  %v842 = vxor.u32 %v840, 2147483648
  %v843 = vmul.f32 %v841, 1.442695
  %v844 = vpow.pop %v843
  %v845 = vmul.f32 %v842, 1.442695
  %v846 = vpow.pop %v845
  %v847 = vadd.f32 %v844, 1.0
  %v848 = vadd.f32 %v846, 1.0
  %v849 = vrcp.pop %v847
  %v850 = vmul.f32 1.0, %v849
  %v851 = vrcp.pop %v848
  %v852 = vmul.f32 1.0, %v851
  %v853 = vmul.f32 %v839, %v850
  %v854 = vmul.f32 %v840, %v852
  %v855 = vld [vmem:[%s3] sm:$0xff]
  %v856 = vld [vmem:[%s3 + $0x8] sm:$0xff]
  %v857 = vld [vmem:[%s4] sm:$0xff]
  %v858 = vld [vmem:[%s4 + $0x8] sm:$0xff]
  %860 = vset.pattern.permute.xlu0 0
  %861 = vperm.xlu0 %860, %v857
  %v862 = vpop.permute.xlu0 %861
  %865 = vset.pattern.permute.xlu0 0
  %866 = vperm.xlu0 %865, %v858
  %v867 = vpop.permute.xlu0 %866
  %vm869 = vcmask 64512
  %v871 = vsel %vm869, %v855, 0
  %v874 = vsel %vm869, %v856, 0
  %876 = vmatprep.subr.mxu0 %v854
  %877 = vmatpush1.msra.mxu0 %v853
  %878 = vmatprep.subr.mxu0 0.0
  %879 = vmatpush1.msra.mxu0 0.0
  %880 = vmatprep.subr.mxu0 0.0
  %881 = vmatpush1.msra.mxu0 0.0
  %882 = vmatprep.subr.mxu0 0.0
  %883 = vmatpush1.msra.mxu0 0.0
  %884 = vmatprep.subr.mxu0 0.0
  %885 = vmatpush1.msra.mxu0 0.0
  %886 = vmatprep.subr.mxu0 0.0
  %887 = vmatpush1.msra.mxu0 0.0
  %888 = vmatprep.subr.mxu0 0.0
  %889 = vmatpush1.msra.mxu0 0.0
  %890 = vmatprep.subr.mxu0 0.0
  %891 = vmatpush1.msra.mxu0 0.0
  %892 = vmatprep.subr.mxu0 0.0
  %893 = vmatpush1.msra.mxu0 0.0
  %894 = vmatprep.subr.mxu0 0.0
  %895 = vmatpush1.msra.mxu0 0.0
  %896 = vmatprep.subr.mxu0 0.0
  %897 = vmatpush1.msra.mxu0 0.0
  %898 = vmatprep.subr.mxu0 0.0
  %899 = vmatpush1.msra.mxu0 0.0
  %900 = vmatprep.subr.mxu0 0.0
  %901 = vmatpush1.msra.mxu0 0.0
  %902 = vmatprep.subr.mxu0 0.0
  %903 = vmatpush1.msra.mxu0 0.0
  %904 = vmatprep.subr.mxu0 0.0
  %905 = vmatpush1.msra.mxu0 0.0
  %906 = vmatprep.subr.mxu0 0.0
  %907 = vmatpush1.msra.mxu0 0.0
  %908 = vmatprep.subr.mxu0 0.0
  %909 = vmatpush1.msra.mxu0 0.0
  %910 = vmatprep.subr.mxu0 0.0
  %911 = vmatpush1.msra.mxu0 0.0
  %912 = vmatprep.subr.mxu0 0.0
  %913 = vmatpush1.msra.mxu0 0.0
  %914 = vmatprep.subr.mxu0 0.0
  %915 = vmatpush1.msra.mxu0 0.0
  %916 = vmatprep.subr.mxu0 0.0
  %917 = vmatpush1.msra.mxu0 0.0
  %918 = vmatprep.subr.mxu0 0.0
  %919 = vmatpush1.msra.mxu0 0.0
  %920 = vmatprep.subr.mxu0 0.0
  %921 = vmatpush1.msra.mxu0 0.0
  %922 = vmatprep.subr.mxu0 0.0
  %923 = vmatpush1.msra.mxu0 0.0
  %924 = vmatprep.subr.mxu0 0.0
  %925 = vmatpush1.msra.mxu0 0.0
  %926 = vmatprep.subr.mxu0 0.0
  %927 = vmatpush1.msra.mxu0 0.0
  %928 = vmatprep.subr.mxu0 0.0
  %929 = vmatpush1.msra.mxu0 0.0
  %930 = vmatprep.subr.mxu0 0.0
  %931 = vmatpush1.msra.mxu0 0.0
  %932 = vmatprep.subr.mxu0 0.0
  %933 = vmatpush1.msra.mxu0 0.0
  %934 = vmatprep.subr.mxu0 0.0
  %935 = vmatpush1.msra.mxu0 0.0
  %936 = vmatprep.subr.mxu0 0.0
  %937 = vmatpush1.msra.mxu0 0.0
  %938 = vmatprep.subr.mxu0 0.0
  %939 = vmatpush1.msra.mxu0 0.0
  %940 = vmatprep.mubr.f32.mxu0 0.0
  %941 = vmatmul.mubr.f32.gmra.mrb[0].mxu0 %v871
  %v942 = vpop.f32.mrb[0].mxu0
  %v943 = vadd.f32 %v862, %v942
  %v944 = vpop.f32.mrb[0].mxu0
  %v945 = vadd.f32 %v862, %v944
  %946 = vmatprep.mubr.f32.mxu0 0.0
  %947 = vmatmul.mubr.f32.gmra.mrb[0].mxu0 %v874
  %v948 = vpop.f32.mrb[0].mxu0
  %v949 = vadd.f32 %v867, %v948
  %v950 = vpop.f32.mrb[0].mxu0
  %v951 = vadd.f32 %v867, %v950
  %952 = vdwg.mxu0
  %v953 = vxor.u32 %v943, 2147483648
  %v954 = vxor.u32 %v945, 2147483648
  %v955 = vxor.u32 %v949, 2147483648
  %v956 = vxor.u32 %v951, 2147483648
  %v957 = vmul.f32 %v953, 1.442695
  %v958 = vpow.pop %v957
  %v959 = vmul.f32 %v954, 1.442695
  %v960 = vpow.pop %v959
  %v961 = vmul.f32 %v955, 1.442695
  %v962 = vpow.pop %v961
  %v963 = vmul.f32 %v956, 1.442695
  %v964 = vpow.pop %v963
  %v965 = vadd.f32 %v958, 1.0
  %v966 = vadd.f32 %v960, 1.0
  %v967 = vadd.f32 %v962, 1.0
  %v968 = vadd.f32 %v964, 1.0
  %v969 = vrcp.pop %v965
  %v970 = vmul.f32 1.0, %v969
  %v971 = vrcp.pop %v966
  %v972 = vmul.f32 1.0, %v971
  %v973 = vrcp.pop %v967
  %v974 = vmul.f32 1.0, %v973
  %v975 = vrcp.pop %v968
  %v976 = vmul.f32 1.0, %v975
  %v977 = vmul.f32 %v943, %v970
  %v978 = vmul.f32 %v945, %v972
  %v979 = vmul.f32 %v949, %v974
  %v980 = vmul.f32 %v951, %v976
  %981 = vst [vmem:[%s5] sm:$0xff] %v977
  %982 = vst [vmem:[%s5 + $0x8] sm:$0xff] %v978
  %983 = vst [vmem:[%s5 + $0x10] sm:$0xff] %v979
  %984 = vst [vmem:[%s5 + $0x18] sm:$0xff] %v980
  %s985 = scalar_lea.vmem %s0, 8
  %v986 = vld [vmem:[%s985] sm:$0x77]
  %v987 = vld [vmem:[%s1] sm:$0xff]
  %v989 = vcombine.high %v986, %v986
  %991 = vrot.lane.b32.xlu0 %v986, 127
  %v992 = vpop.permute.xlu0 %991
  %993 = vrot.lane.b32.xlu0 %v989, 127
  %v994 = vpop.permute.xlu0 %993
  %v995 = vsel %vm31, %v992, %v994
  %v996 = vsel %vm31, %v994, %v992
  %v997 = vld [vmem:[%s34] sm:$0xff]
  %v999 = vsel %vm36, %v997, 0
  %v1002 = vsel %vm40, %v995, 0
  %v1005 = vsel %vm40, %v996, 0
  %1007 = vmatprep.subr.mxu0 %v1005
  %1008 = vmatpush1.msra.mxu0 %v1002
  %1009 = vmatprep.subr.mxu0 0.0
  %1010 = vmatpush1.msra.mxu0 0.0
  %1011 = vmatprep.subr.mxu0 0.0
  %1012 = vmatpush1.msra.mxu0 0.0
  %1013 = vmatprep.subr.mxu0 0.0
  %1014 = vmatpush1.msra.mxu0 0.0
  %1015 = vmatprep.subr.mxu0 0.0
  %1016 = vmatpush1.msra.mxu0 0.0
  %1017 = vmatprep.subr.mxu0 0.0
  %1018 = vmatpush1.msra.mxu0 0.0
  %1019 = vmatprep.subr.mxu0 0.0
  %1020 = vmatpush1.msra.mxu0 0.0
  %1021 = vmatprep.subr.mxu0 0.0
  %1022 = vmatpush1.msra.mxu0 0.0
  %1023 = vmatprep.subr.mxu0 0.0
  %1024 = vmatpush1.msra.mxu0 0.0
  %1025 = vmatprep.subr.mxu0 0.0
  %1026 = vmatpush1.msra.mxu0 0.0
  %1027 = vmatprep.subr.mxu0 0.0
  %1028 = vmatpush1.msra.mxu0 0.0
  %1029 = vmatprep.subr.mxu0 0.0
  %1030 = vmatpush1.msra.mxu0 0.0
  %1031 = vmatprep.subr.mxu0 0.0
  %1032 = vmatpush1.msra.mxu0 0.0
  %1033 = vmatprep.subr.mxu0 0.0
  %1034 = vmatpush1.msra.mxu0 0.0
  %1035 = vmatprep.subr.mxu0 0.0
  %1036 = vmatpush1.msra.mxu0 0.0
  %1037 = vmatprep.subr.mxu0 0.0
  %1038 = vmatpush1.msra.mxu0 0.0
  %1039 = vmatprep.subr.mxu0 0.0
  %1040 = vmatpush1.msra.mxu0 0.0
  %1041 = vmatprep.subr.mxu0 0.0
  %1042 = vmatpush1.msra.mxu0 0.0
  %1043 = vmatprep.subr.mxu0 0.0
  %1044 = vmatpush1.msra.mxu0 0.0
  %1045 = vmatprep.subr.mxu0 0.0
  %1046 = vmatpush1.msra.mxu0 0.0
  %1047 = vmatprep.subr.mxu0 0.0
  %1048 = vmatpush1.msra.mxu0 0.0
  %1049 = vmatprep.subr.mxu0 0.0
  %1050 = vmatpush1.msra.mxu0 0.0
  %1051 = vmatprep.subr.mxu0 0.0
  %1052 = vmatpush1.msra.mxu0 0.0
  %1053 = vmatprep.subr.mxu0 0.0
  %1054 = vmatpush1.msra.mxu0 0.0
  %1055 = vmatprep.subr.mxu0 0.0
  %1056 = vmatpush1.msra.mxu0 0.0
  %1057 = vmatprep.subr.mxu0 0.0
  %1058 = vmatpush1.msra.mxu0 0.0
  %1059 = vmatprep.subr.mxu0 0.0
  %1060 = vmatpush1.msra.mxu0 0.0
  %1061 = vmatprep.subr.mxu0 0.0
  %1062 = vmatpush1.msra.mxu0 0.0
  %1063 = vmatprep.subr.mxu0 0.0
  %1064 = vmatpush1.msra.mxu0 0.0
  %1065 = vmatprep.subr.mxu0 0.0
  %1066 = vmatpush1.msra.mxu0 0.0
  %1067 = vmatprep.subr.mxu0 0.0
  %1068 = vmatpush1.msra.mxu0 0.0
  %1069 = vmatprep.subr.mxu0 0.0
  %1070 = vmatpush1.msra.mxu0 0.0
  %1071 = vmatprep.mubr.f32.mxu0 0.0
  %1072 = vmatmul.mubr.f32.gmra.mrb[0].mxu0 %v999
  %v1073 = vpop.f32.mrb[0].mxu0
  %v1074 = vadd.f32 0.0, %v1073
  %v1075 = vpop.f32.mrb[0].mxu0
  %v1076 = vadd.f32 0.0, %v1075
  %1077 = vdwg.mxu0
  %v1079 = vsel %vm36, %v987, 0
  %v1081 = vsel %vm40, %v986, 0
  %v1083 = vsel %vm40, %v989, 0
  %1085 = vmatprep.subr.mxu0 %v1083
  %1086 = vmatpush1.msra.mxu0 %v1081
  %1087 = vmatprep.subr.mxu0 0.0
  %1088 = vmatpush1.msra.mxu0 0.0
  %1089 = vmatprep.subr.mxu0 0.0
  %1090 = vmatpush1.msra.mxu0 0.0
  %1091 = vmatprep.subr.mxu0 0.0
  %1092 = vmatpush1.msra.mxu0 0.0
  %1093 = vmatprep.subr.mxu0 0.0
  %1094 = vmatpush1.msra.mxu0 0.0
  %1095 = vmatprep.subr.mxu0 0.0
  %1096 = vmatpush1.msra.mxu0 0.0
  %1097 = vmatprep.subr.mxu0 0.0
  %1098 = vmatpush1.msra.mxu0 0.0
  %1099 = vmatprep.subr.mxu0 0.0
  %1100 = vmatpush1.msra.mxu0 0.0
  %1101 = vmatprep.subr.mxu0 0.0
  %1102 = vmatpush1.msra.mxu0 0.0
  %1103 = vmatprep.subr.mxu0 0.0
  %1104 = vmatpush1.msra.mxu0 0.0
  %1105 = vmatprep.subr.mxu0 0.0
  %1106 = vmatpush1.msra.mxu0 0.0
  %1107 = vmatprep.subr.mxu0 0.0
  %1108 = vmatpush1.msra.mxu0 0.0
  %1109 = vmatprep.subr.mxu0 0.0
  %1110 = vmatpush1.msra.mxu0 0.0
  %1111 = vmatprep.subr.mxu0 0.0
  %1112 = vmatpush1.msra.mxu0 0.0
  %1113 = vmatprep.subr.mxu0 0.0
  %1114 = vmatpush1.msra.mxu0 0.0
  %1115 = vmatprep.subr.mxu0 0.0
  %1116 = vmatpush1.msra.mxu0 0.0
  %1117 = vmatprep.subr.mxu0 0.0
  %1118 = vmatpush1.msra.mxu0 0.0
  %1119 = vmatprep.subr.mxu0 0.0
  %1120 = vmatpush1.msra.mxu0 0.0
  %1121 = vmatprep.subr.mxu0 0.0
  %1122 = vmatpush1.msra.mxu0 0.0
  %1123 = vmatprep.subr.mxu0 0.0
  %1124 = vmatpush1.msra.mxu0 0.0
  %1125 = vmatprep.subr.mxu0 0.0
  %1126 = vmatpush1.msra.mxu0 0.0
  %1127 = vmatprep.subr.mxu0 0.0
  %1128 = vmatpush1.msra.mxu0 0.0
  %1129 = vmatprep.subr.mxu0 0.0
  %1130 = vmatpush1.msra.mxu0 0.0
  %1131 = vmatprep.subr.mxu0 0.0
  %1132 = vmatpush1.msra.mxu0 0.0
  %1133 = vmatprep.subr.mxu0 0.0
  %1134 = vmatpush1.msra.mxu0 0.0
  %1135 = vmatprep.subr.mxu0 0.0
  %1136 = vmatpush1.msra.mxu0 0.0
  %1137 = vmatprep.subr.mxu0 0.0
  %1138 = vmatpush1.msra.mxu0 0.0
  %1139 = vmatprep.subr.mxu0 0.0
  %1140 = vmatpush1.msra.mxu0 0.0
  %1141 = vmatprep.subr.mxu0 0.0
  %1142 = vmatpush1.msra.mxu0 0.0
  %1143 = vmatprep.subr.mxu0 0.0
  %1144 = vmatpush1.msra.mxu0 0.0
  %1145 = vmatprep.subr.mxu0 0.0
  %1146 = vmatpush1.msra.mxu0 0.0
  %1147 = vmatprep.subr.mxu0 0.0
  %1148 = vmatpush1.msra.mxu0 0.0
  %1149 = vmatprep.mubr.f32.mxu0 0.0
  %1150 = vmatmul.mubr.f32.gmra.mrb[0].mxu0 %v1079
  %v1151 = vpop.f32.mrb[0].mxu0
  %v1152 = vadd.f32 %v1074, %v1151
  %v1153 = vpop.f32.mrb[0].mxu0
  %v1154 = vadd.f32 %v1076, %v1153
  %1155 = vdwg.mxu0
  %1156 = vrot.lane.b32.xlu0 %v986, 126
  %v1157 = vpop.permute.xlu0 %1156
  %1158 = vrot.lane.b32.xlu0 %v989, 126
  %v1159 = vpop.permute.xlu0 %1158
  %v1160 = vsel %vm200, %v1157, %v1159
  %v1161 = vsel %vm200, %v1159, %v1157
  %v1162 = vld [vmem:[%s203] sm:$0xff]
  %v1164 = vsel %vm36, %v1162, 0
  %v1167 = vsel %vm40, %v1160, 0
  %v1170 = vsel %vm40, %v1161, 0
  %1172 = vmatprep.subr.mxu0 %v1170
  %1173 = vmatpush1.msra.mxu0 %v1167
  %1174 = vmatprep.subr.mxu0 0.0
  %1175 = vmatpush1.msra.mxu0 0.0
  %1176 = vmatprep.subr.mxu0 0.0
  %1177 = vmatpush1.msra.mxu0 0.0
  %1178 = vmatprep.subr.mxu0 0.0
  %1179 = vmatpush1.msra.mxu0 0.0
  %1180 = vmatprep.subr.mxu0 0.0
  %1181 = vmatpush1.msra.mxu0 0.0
  %1182 = vmatprep.subr.mxu0 0.0
  %1183 = vmatpush1.msra.mxu0 0.0
  %1184 = vmatprep.subr.mxu0 0.0
  %1185 = vmatpush1.msra.mxu0 0.0
  %1186 = vmatprep.subr.mxu0 0.0
  %1187 = vmatpush1.msra.mxu0 0.0
  %1188 = vmatprep.subr.mxu0 0.0
  %1189 = vmatpush1.msra.mxu0 0.0
  %1190 = vmatprep.subr.mxu0 0.0
  %1191 = vmatpush1.msra.mxu0 0.0
  %1192 = vmatprep.subr.mxu0 0.0
  %1193 = vmatpush1.msra.mxu0 0.0
  %1194 = vmatprep.subr.mxu0 0.0
  %1195 = vmatpush1.msra.mxu0 0.0
  %1196 = vmatprep.subr.mxu0 0.0
  %1197 = vmatpush1.msra.mxu0 0.0
  %1198 = vmatprep.subr.mxu0 0.0
  %1199 = vmatpush1.msra.mxu0 0.0
  %1200 = vmatprep.subr.mxu0 0.0
  %1201 = vmatpush1.msra.mxu0 0.0
  %1202 = vmatprep.subr.mxu0 0.0
  %1203 = vmatpush1.msra.mxu0 0.0
  %1204 = vmatprep.subr.mxu0 0.0
  %1205 = vmatpush1.msra.mxu0 0.0
  %1206 = vmatprep.subr.mxu0 0.0
  %1207 = vmatpush1.msra.mxu0 0.0
  %1208 = vmatprep.subr.mxu0 0.0
  %1209 = vmatpush1.msra.mxu0 0.0
  %1210 = vmatprep.subr.mxu0 0.0
  %1211 = vmatpush1.msra.mxu0 0.0
  %1212 = vmatprep.subr.mxu0 0.0
  %1213 = vmatpush1.msra.mxu0 0.0
  %1214 = vmatprep.subr.mxu0 0.0
  %1215 = vmatpush1.msra.mxu0 0.0
  %1216 = vmatprep.subr.mxu0 0.0
  %1217 = vmatpush1.msra.mxu0 0.0
  %1218 = vmatprep.subr.mxu0 0.0
  %1219 = vmatpush1.msra.mxu0 0.0
  %1220 = vmatprep.subr.mxu0 0.0
  %1221 = vmatpush1.msra.mxu0 0.0
  %1222 = vmatprep.subr.mxu0 0.0
  %1223 = vmatpush1.msra.mxu0 0.0
  %1224 = vmatprep.subr.mxu0 0.0
  %1225 = vmatpush1.msra.mxu0 0.0
  %1226 = vmatprep.subr.mxu0 0.0
  %1227 = vmatpush1.msra.mxu0 0.0
  %1228 = vmatprep.subr.mxu0 0.0
  %1229 = vmatpush1.msra.mxu0 0.0
  %1230 = vmatprep.subr.mxu0 0.0
  %1231 = vmatpush1.msra.mxu0 0.0
  %1232 = vmatprep.subr.mxu0 0.0
  %1233 = vmatpush1.msra.mxu0 0.0
  %1234 = vmatprep.subr.mxu0 0.0
  %1235 = vmatpush1.msra.mxu0 0.0
  %1236 = vmatprep.mubr.f32.mxu0 0.0
  %1237 = vmatmul.mubr.f32.gmra.mrb[0].mxu0 %v1164
  %v1238 = vpop.f32.mrb[0].mxu0
  %v1239 = vadd.f32 0.0, %v1238
  %v1240 = vpop.f32.mrb[0].mxu0
  %v1241 = vadd.f32 0.0, %v1240
  %1242 = vdwg.mxu0
  %v1243 = vadd.f32 %v1152, %v1239
  %v1244 = vadd.f32 %v1154, %v1241
  %1245 = vrot.lane.b32.xlu0 %v986, 112
  %v1246 = vpop.permute.xlu0 %1245
  %1247 = vrot.lane.b32.xlu0 %v989, 112
  %v1248 = vpop.permute.xlu0 %1247
  %v1249 = vsel %vm291, %v1246, %v1248
  %v1250 = vsel %vm291, %v1248, %v1246
  %v1251 = vld [vmem:[%s294] sm:$0xff]
  %v1253 = vsel %vm36, %v1251, 0
  %v1256 = vsel %vm40, %v1249, 0
  %v1259 = vsel %vm40, %v1250, 0
  %1261 = vmatprep.subr.mxu0 %v1259
  %1262 = vmatpush1.msra.mxu0 %v1256
  %1263 = vmatprep.subr.mxu0 0.0
  %1264 = vmatpush1.msra.mxu0 0.0
  %1265 = vmatprep.subr.mxu0 0.0
  %1266 = vmatpush1.msra.mxu0 0.0
  %1267 = vmatprep.subr.mxu0 0.0
  %1268 = vmatpush1.msra.mxu0 0.0
  %1269 = vmatprep.subr.mxu0 0.0
  %1270 = vmatpush1.msra.mxu0 0.0
  %1271 = vmatprep.subr.mxu0 0.0
  %1272 = vmatpush1.msra.mxu0 0.0
  %1273 = vmatprep.subr.mxu0 0.0
  %1274 = vmatpush1.msra.mxu0 0.0
  %1275 = vmatprep.subr.mxu0 0.0
  %1276 = vmatpush1.msra.mxu0 0.0
  %1277 = vmatprep.subr.mxu0 0.0
  %1278 = vmatpush1.msra.mxu0 0.0
  %1279 = vmatprep.subr.mxu0 0.0
  %1280 = vmatpush1.msra.mxu0 0.0
  %1281 = vmatprep.subr.mxu0 0.0
  %1282 = vmatpush1.msra.mxu0 0.0
  %1283 = vmatprep.subr.mxu0 0.0
  %1284 = vmatpush1.msra.mxu0 0.0
  %1285 = vmatprep.subr.mxu0 0.0
  %1286 = vmatpush1.msra.mxu0 0.0
  %1287 = vmatprep.subr.mxu0 0.0
  %1288 = vmatpush1.msra.mxu0 0.0
  %1289 = vmatprep.subr.mxu0 0.0
  %1290 = vmatpush1.msra.mxu0 0.0
  %1291 = vmatprep.subr.mxu0 0.0
  %1292 = vmatpush1.msra.mxu0 0.0
  %1293 = vmatprep.subr.mxu0 0.0
  %1294 = vmatpush1.msra.mxu0 0.0
  %1295 = vmatprep.subr.mxu0 0.0
  %1296 = vmatpush1.msra.mxu0 0.0
  %1297 = vmatprep.subr.mxu0 0.0
  %1298 = vmatpush1.msra.mxu0 0.0
  %1299 = vmatprep.subr.mxu0 0.0
  %1300 = vmatpush1.msra.mxu0 0.0
  %1301 = vmatprep.subr.mxu0 0.0
  %1302 = vmatpush1.msra.mxu0 0.0
  %1303 = vmatprep.subr.mxu0 0.0
  %1304 = vmatpush1.msra.mxu0 0.0
  %1305 = vmatprep.subr.mxu0 0.0
  %1306 = vmatpush1.msra.mxu0 0.0
  %1307 = vmatprep.subr.mxu0 0.0
  %1308 = vmatpush1.msra.mxu0 0.0
  %1309 = vmatprep.subr.mxu0 0.0
  %1310 = vmatpush1.msra.mxu0 0.0
  %1311 = vmatprep.subr.mxu0 0.0
  %1312 = vmatpush1.msra.mxu0 0.0
  %1313 = vmatprep.subr.mxu0 0.0
  %1314 = vmatpush1.msra.mxu0 0.0
  %1315 = vmatprep.subr.mxu0 0.0
  %1316 = vmatpush1.msra.mxu0 0.0
  %1317 = vmatprep.subr.mxu0 0.0
  %1318 = vmatpush1.msra.mxu0 0.0
  %1319 = vmatprep.subr.mxu0 0.0
  %1320 = vmatpush1.msra.mxu0 0.0
  %1321 = vmatprep.subr.mxu0 0.0
  %1322 = vmatpush1.msra.mxu0 0.0
  %1323 = vmatprep.subr.mxu0 0.0
  %1324 = vmatpush1.msra.mxu0 0.0
  %1325 = vmatprep.mubr.f32.mxu0 0.0
  %1326 = vmatmul.mubr.f32.gmra.mrb[0].mxu0 %v1253
  %v1327 = vpop.f32.mrb[0].mxu0
  %v1328 = vadd.f32 0.0, %v1327
  %v1329 = vpop.f32.mrb[0].mxu0
  %v1330 = vadd.f32 0.0, %v1329
  %1331 = vdwg.mxu0
  %v1332 = vadd.f32 %v1243, %v1328
  %v1333 = vadd.f32 %v1244, %v1330
  %1334 = vrot.lane.b32.xlu0 %v986, 111
  %v1335 = vpop.permute.xlu0 %1334
  %1336 = vrot.lane.b32.xlu0 %v989, 111
  %v1337 = vpop.permute.xlu0 %1336
  %v1338 = vsel %vm382, %v1335, %v1337
  %v1339 = vsel %vm382, %v1337, %v1335
  %v1340 = vld [vmem:[%s385] sm:$0xff]
  %v1342 = vsel %vm36, %v1340, 0
  %v1345 = vsel %vm40, %v1338, 0
  %v1348 = vsel %vm40, %v1339, 0
  %1350 = vmatprep.subr.mxu0 %v1348
  %1351 = vmatpush1.msra.mxu0 %v1345
  %1352 = vmatprep.subr.mxu0 0.0
  %1353 = vmatpush1.msra.mxu0 0.0
  %1354 = vmatprep.subr.mxu0 0.0
  %1355 = vmatpush1.msra.mxu0 0.0
  %1356 = vmatprep.subr.mxu0 0.0
  %1357 = vmatpush1.msra.mxu0 0.0
  %1358 = vmatprep.subr.mxu0 0.0
  %1359 = vmatpush1.msra.mxu0 0.0
  %1360 = vmatprep.subr.mxu0 0.0
  %1361 = vmatpush1.msra.mxu0 0.0
  %1362 = vmatprep.subr.mxu0 0.0
  %1363 = vmatpush1.msra.mxu0 0.0
  %1364 = vmatprep.subr.mxu0 0.0
  %1365 = vmatpush1.msra.mxu0 0.0
  %1366 = vmatprep.subr.mxu0 0.0
  %1367 = vmatpush1.msra.mxu0 0.0
  %1368 = vmatprep.subr.mxu0 0.0
  %1369 = vmatpush1.msra.mxu0 0.0
  %1370 = vmatprep.subr.mxu0 0.0
  %1371 = vmatpush1.msra.mxu0 0.0
  %1372 = vmatprep.subr.mxu0 0.0
  %1373 = vmatpush1.msra.mxu0 0.0
  %1374 = vmatprep.subr.mxu0 0.0
  %1375 = vmatpush1.msra.mxu0 0.0
  %1376 = vmatprep.subr.mxu0 0.0
  %1377 = vmatpush1.msra.mxu0 0.0
  %1378 = vmatprep.subr.mxu0 0.0
  %1379 = vmatpush1.msra.mxu0 0.0
  %1380 = vmatprep.subr.mxu0 0.0
  %1381 = vmatpush1.msra.mxu0 0.0
  %1382 = vmatprep.subr.mxu0 0.0
  %1383 = vmatpush1.msra.mxu0 0.0
  %1384 = vmatprep.subr.mxu0 0.0
  %1385 = vmatpush1.msra.mxu0 0.0
  %1386 = vmatprep.subr.mxu0 0.0
  %1387 = vmatpush1.msra.mxu0 0.0
  %1388 = vmatprep.subr.mxu0 0.0
  %1389 = vmatpush1.msra.mxu0 0.0
  %1390 = vmatprep.subr.mxu0 0.0
  %1391 = vmatpush1.msra.mxu0 0.0
  %1392 = vmatprep.subr.mxu0 0.0
  %1393 = vmatpush1.msra.mxu0 0.0
  %1394 = vmatprep.subr.mxu0 0.0
  %1395 = vmatpush1.msra.mxu0 0.0
  %1396 = vmatprep.subr.mxu0 0.0
  %1397 = vmatpush1.msra.mxu0 0.0
  %1398 = vmatprep.subr.mxu0 0.0
  %1399 = vmatpush1.msra.mxu0 0.0
  %1400 = vmatprep.subr.mxu0 0.0
  %1401 = vmatpush1.msra.mxu0 0.0
  %1402 = vmatprep.subr.mxu0 0.0
  %1403 = vmatpush1.msra.mxu0 0.0
  %1404 = vmatprep.subr.mxu0 0.0
  %1405 = vmatpush1.msra.mxu0 0.0
  %1406 = vmatprep.subr.mxu0 0.0
  %1407 = vmatpush1.msra.mxu0 0.0
  %1408 = vmatprep.subr.mxu0 0.0
  %1409 = vmatpush1.msra.mxu0 0.0
  %1410 = vmatprep.subr.mxu0 0.0
  %1411 = vmatpush1.msra.mxu0 0.0
  %1412 = vmatprep.subr.mxu0 0.0
  %1413 = vmatpush1.msra.mxu0 0.0
  %1414 = vmatprep.mubr.f32.mxu0 0.0
  %1415 = vmatmul.mubr.f32.gmra.mrb[0].mxu0 %v1342
  %v1416 = vpop.f32.mrb[0].mxu0
  %v1417 = vadd.f32 0.0, %v1416
  %v1418 = vpop.f32.mrb[0].mxu0
  %v1419 = vadd.f32 0.0, %v1418
  %1420 = vdwg.mxu0
  %v1421 = vadd.f32 %v1332, %v1417
  %v1422 = vadd.f32 %v1333, %v1419
  %1423 = vrot.lane.b32.xlu0 %v986, 110
  %v1424 = vpop.permute.xlu0 %1423
  %1425 = vrot.lane.b32.xlu0 %v989, 110
  %v1426 = vpop.permute.xlu0 %1425
  %v1427 = vsel %vm473, %v1424, %v1426
  %v1428 = vsel %vm473, %v1426, %v1424
  %v1429 = vld [vmem:[%s476] sm:$0xff]
  %v1431 = vsel %vm36, %v1429, 0
  %v1434 = vsel %vm40, %v1427, 0
  %v1437 = vsel %vm40, %v1428, 0
  %1439 = vmatprep.subr.mxu0 %v1437
  %1440 = vmatpush1.msra.mxu0 %v1434
  %1441 = vmatprep.subr.mxu0 0.0
  %1442 = vmatpush1.msra.mxu0 0.0
  %1443 = vmatprep.subr.mxu0 0.0
  %1444 = vmatpush1.msra.mxu0 0.0
  %1445 = vmatprep.subr.mxu0 0.0
  %1446 = vmatpush1.msra.mxu0 0.0
  %1447 = vmatprep.subr.mxu0 0.0
  %1448 = vmatpush1.msra.mxu0 0.0
  %1449 = vmatprep.subr.mxu0 0.0
  %1450 = vmatpush1.msra.mxu0 0.0
  %1451 = vmatprep.subr.mxu0 0.0
  %1452 = vmatpush1.msra.mxu0 0.0
  %1453 = vmatprep.subr.mxu0 0.0
  %1454 = vmatpush1.msra.mxu0 0.0
  %1455 = vmatprep.subr.mxu0 0.0
  %1456 = vmatpush1.msra.mxu0 0.0
  %1457 = vmatprep.subr.mxu0 0.0
  %1458 = vmatpush1.msra.mxu0 0.0
  %1459 = vmatprep.subr.mxu0 0.0
  %1460 = vmatpush1.msra.mxu0 0.0
  %1461 = vmatprep.subr.mxu0 0.0
  %1462 = vmatpush1.msra.mxu0 0.0
  %1463 = vmatprep.subr.mxu0 0.0
  %1464 = vmatpush1.msra.mxu0 0.0
  %1465 = vmatprep.subr.mxu0 0.0
  %1466 = vmatpush1.msra.mxu0 0.0
  %1467 = vmatprep.subr.mxu0 0.0
  %1468 = vmatpush1.msra.mxu0 0.0
  %1469 = vmatprep.subr.mxu0 0.0
  %1470 = vmatpush1.msra.mxu0 0.0
  %1471 = vmatprep.subr.mxu0 0.0
  %1472 = vmatpush1.msra.mxu0 0.0
  %1473 = vmatprep.subr.mxu0 0.0
  %1474 = vmatpush1.msra.mxu0 0.0
  %1475 = vmatprep.subr.mxu0 0.0
  %1476 = vmatpush1.msra.mxu0 0.0
  %1477 = vmatprep.subr.mxu0 0.0
  %1478 = vmatpush1.msra.mxu0 0.0
  %1479 = vmatprep.subr.mxu0 0.0
  %1480 = vmatpush1.msra.mxu0 0.0
  %1481 = vmatprep.subr.mxu0 0.0
  %1482 = vmatpush1.msra.mxu0 0.0
  %1483 = vmatprep.subr.mxu0 0.0
  %1484 = vmatpush1.msra.mxu0 0.0
  %1485 = vmatprep.subr.mxu0 0.0
  %1486 = vmatpush1.msra.mxu0 0.0
  %1487 = vmatprep.subr.mxu0 0.0
  %1488 = vmatpush1.msra.mxu0 0.0
  %1489 = vmatprep.subr.mxu0 0.0
  %1490 = vmatpush1.msra.mxu0 0.0
  %1491 = vmatprep.subr.mxu0 0.0
  %1492 = vmatpush1.msra.mxu0 0.0
  %1493 = vmatprep.subr.mxu0 0.0
  %1494 = vmatpush1.msra.mxu0 0.0
  %1495 = vmatprep.subr.mxu0 0.0
  %1496 = vmatpush1.msra.mxu0 0.0
  %1497 = vmatprep.subr.mxu0 0.0
  %1498 = vmatpush1.msra.mxu0 0.0
  %1499 = vmatprep.subr.mxu0 0.0
  %1500 = vmatpush1.msra.mxu0 0.0
  %1501 = vmatprep.subr.mxu0 0.0
  %1502 = vmatpush1.msra.mxu0 0.0
  %1503 = vmatprep.mubr.f32.mxu0 0.0
  %1504 = vmatmul.mubr.f32.gmra.mrb[0].mxu0 %v1431
  %v1505 = vpop.f32.mrb[0].mxu0
  %v1506 = vadd.f32 0.0, %v1505
  %v1507 = vpop.f32.mrb[0].mxu0
  %v1508 = vadd.f32 0.0, %v1507
  %1509 = vdwg.mxu0
  %v1510 = vadd.f32 %v1421, %v1506
  %v1511 = vadd.f32 %v1422, %v1508
  %1512 = vrot.lane.b32.xlu0 %v986, 96
  %v1513 = vpop.permute.xlu0 %1512
  %1514 = vrot.lane.b32.xlu0 %v989, 96
  %v1515 = vpop.permute.xlu0 %1514
  %v1516 = vsel %vm564, %v1513, %v1515
  %v1517 = vsel %vm564, %v1515, %v1513
  %v1518 = vld [vmem:[%s567] sm:$0xff]
  %v1520 = vsel %vm36, %v1518, 0
  %v1523 = vsel %vm40, %v1516, 0
  %v1526 = vsel %vm40, %v1517, 0
  %1528 = vmatprep.subr.mxu0 %v1526
  %1529 = vmatpush1.msra.mxu0 %v1523
  %1530 = vmatprep.subr.mxu0 0.0
  %1531 = vmatpush1.msra.mxu0 0.0
  %1532 = vmatprep.subr.mxu0 0.0
  %1533 = vmatpush1.msra.mxu0 0.0
  %1534 = vmatprep.subr.mxu0 0.0
  %1535 = vmatpush1.msra.mxu0 0.0
  %1536 = vmatprep.subr.mxu0 0.0
  %1537 = vmatpush1.msra.mxu0 0.0
  %1538 = vmatprep.subr.mxu0 0.0
  %1539 = vmatpush1.msra.mxu0 0.0
  %1540 = vmatprep.subr.mxu0 0.0
  %1541 = vmatpush1.msra.mxu0 0.0
  %1542 = vmatprep.subr.mxu0 0.0
  %1543 = vmatpush1.msra.mxu0 0.0
  %1544 = vmatprep.subr.mxu0 0.0
  %1545 = vmatpush1.msra.mxu0 0.0
  %1546 = vmatprep.subr.mxu0 0.0
  %1547 = vmatpush1.msra.mxu0 0.0
  %1548 = vmatprep.subr.mxu0 0.0
  %1549 = vmatpush1.msra.mxu0 0.0
  %1550 = vmatprep.subr.mxu0 0.0
  %1551 = vmatpush1.msra.mxu0 0.0
  %1552 = vmatprep.subr.mxu0 0.0
  %1553 = vmatpush1.msra.mxu0 0.0
  %1554 = vmatprep.subr.mxu0 0.0
  %1555 = vmatpush1.msra.mxu0 0.0
  %1556 = vmatprep.subr.mxu0 0.0
  %1557 = vmatpush1.msra.mxu0 0.0
  %1558 = vmatprep.subr.mxu0 0.0
  %1559 = vmatpush1.msra.mxu0 0.0
  %1560 = vmatprep.subr.mxu0 0.0
  %1561 = vmatpush1.msra.mxu0 0.0
  %1562 = vmatprep.subr.mxu0 0.0
  %1563 = vmatpush1.msra.mxu0 0.0
  %1564 = vmatprep.subr.mxu0 0.0
  %1565 = vmatpush1.msra.mxu0 0.0
  %1566 = vmatprep.subr.mxu0 0.0
  %1567 = vmatpush1.msra.mxu0 0.0
  %1568 = vmatprep.subr.mxu0 0.0
  %1569 = vmatpush1.msra.mxu0 0.0
  %1570 = vmatprep.subr.mxu0 0.0
  %1571 = vmatpush1.msra.mxu0 0.0
  %1572 = vmatprep.subr.mxu0 0.0
  %1573 = vmatpush1.msra.mxu0 0.0
  %1574 = vmatprep.subr.mxu0 0.0
  %1575 = vmatpush1.msra.mxu0 0.0
  %1576 = vmatprep.subr.mxu0 0.0
  %1577 = vmatpush1.msra.mxu0 0.0
  %1578 = vmatprep.subr.mxu0 0.0
  %1579 = vmatpush1.msra.mxu0 0.0
  %1580 = vmatprep.subr.mxu0 0.0
  %1581 = vmatpush1.msra.mxu0 0.0
  %1582 = vmatprep.subr.mxu0 0.0
  %1583 = vmatpush1.msra.mxu0 0.0
  %1584 = vmatprep.subr.mxu0 0.0
  %1585 = vmatpush1.msra.mxu0 0.0
  %1586 = vmatprep.subr.mxu0 0.0
  %1587 = vmatpush1.msra.mxu0 0.0
  %1588 = vmatprep.subr.mxu0 0.0
  %1589 = vmatpush1.msra.mxu0 0.0
  %1590 = vmatprep.subr.mxu0 0.0
  %1591 = vmatpush1.msra.mxu0 0.0
  %1592 = vmatprep.mubr.f32.mxu0 0.0
  %1593 = vmatmul.mubr.f32.gmra.mrb[0].mxu0 %v1520
  %v1594 = vpop.f32.mrb[0].mxu0
  %v1595 = vadd.f32 0.0, %v1594
  %v1596 = vpop.f32.mrb[0].mxu0
  %v1597 = vadd.f32 0.0, %v1596
  %1598 = vdwg.mxu0
  %v1599 = vadd.f32 %v1510, %v1595
  %v1600 = vadd.f32 %v1511, %v1597
  %1601 = vrot.lane.b32.xlu0 %v986, 95
  %v1602 = vpop.permute.xlu0 %1601
  %1603 = vrot.lane.b32.xlu0 %v989, 95
  %v1604 = vpop.permute.xlu0 %1603
  %v1605 = vsel %vm655, %v1602, %v1604
  %v1606 = vsel %vm655, %v1604, %v1602
  %v1607 = vld [vmem:[%s658] sm:$0xff]
  %v1609 = vsel %vm36, %v1607, 0
  %v1612 = vsel %vm40, %v1605, 0
  %v1615 = vsel %vm40, %v1606, 0
  %1617 = vmatprep.subr.mxu0 %v1615
  %1618 = vmatpush1.msra.mxu0 %v1612
  %1619 = vmatprep.subr.mxu0 0.0
  %1620 = vmatpush1.msra.mxu0 0.0
  %1621 = vmatprep.subr.mxu0 0.0
  %1622 = vmatpush1.msra.mxu0 0.0
  %1623 = vmatprep.subr.mxu0 0.0
  %1624 = vmatpush1.msra.mxu0 0.0
  %1625 = vmatprep.subr.mxu0 0.0
  %1626 = vmatpush1.msra.mxu0 0.0
  %1627 = vmatprep.subr.mxu0 0.0
  %1628 = vmatpush1.msra.mxu0 0.0
  %1629 = vmatprep.subr.mxu0 0.0
  %1630 = vmatpush1.msra.mxu0 0.0
  %1631 = vmatprep.subr.mxu0 0.0
  %1632 = vmatpush1.msra.mxu0 0.0
  %1633 = vmatprep.subr.mxu0 0.0
  %1634 = vmatpush1.msra.mxu0 0.0
  %1635 = vmatprep.subr.mxu0 0.0
  %1636 = vmatpush1.msra.mxu0 0.0
  %1637 = vmatprep.subr.mxu0 0.0
  %1638 = vmatpush1.msra.mxu0 0.0
  %1639 = vmatprep.subr.mxu0 0.0
  %1640 = vmatpush1.msra.mxu0 0.0
  %1641 = vmatprep.subr.mxu0 0.0
  %1642 = vmatpush1.msra.mxu0 0.0
  %1643 = vmatprep.subr.mxu0 0.0
  %1644 = vmatpush1.msra.mxu0 0.0
  %1645 = vmatprep.subr.mxu0 0.0
  %1646 = vmatpush1.msra.mxu0 0.0
  %1647 = vmatprep.subr.mxu0 0.0
  %1648 = vmatpush1.msra.mxu0 0.0
  %1649 = vmatprep.subr.mxu0 0.0
  %1650 = vmatpush1.msra.mxu0 0.0
  %1651 = vmatprep.subr.mxu0 0.0
  %1652 = vmatpush1.msra.mxu0 0.0
  %1653 = vmatprep.subr.mxu0 0.0
  %1654 = vmatpush1.msra.mxu0 0.0
  %1655 = vmatprep.subr.mxu0 0.0
  %1656 = vmatpush1.msra.mxu0 0.0
  %1657 = vmatprep.subr.mxu0 0.0
  %1658 = vmatpush1.msra.mxu0 0.0
  %1659 = vmatprep.subr.mxu0 0.0
  %1660 = vmatpush1.msra.mxu0 0.0
  %1661 = vmatprep.subr.mxu0 0.0
  %1662 = vmatpush1.msra.mxu0 0.0
  %1663 = vmatprep.subr.mxu0 0.0
  %1664 = vmatpush1.msra.mxu0 0.0
  %1665 = vmatprep.subr.mxu0 0.0
  %1666 = vmatpush1.msra.mxu0 0.0
  %1667 = vmatprep.subr.mxu0 0.0
  %1668 = vmatpush1.msra.mxu0 0.0
  %1669 = vmatprep.subr.mxu0 0.0
  %1670 = vmatpush1.msra.mxu0 0.0
  %1671 = vmatprep.subr.mxu0 0.0
  %1672 = vmatpush1.msra.mxu0 0.0
  %1673 = vmatprep.subr.mxu0 0.0
  %1674 = vmatpush1.msra.mxu0 0.0
  %1675 = vmatprep.subr.mxu0 0.0
  %1676 = vmatpush1.msra.mxu0 0.0
  %1677 = vmatprep.subr.mxu0 0.0
  %1678 = vmatpush1.msra.mxu0 0.0
  %1679 = vmatprep.subr.mxu0 0.0
  %1680 = vmatpush1.msra.mxu0 0.0
  %1681 = vmatprep.mubr.f32.mxu0 0.0
  %1682 = vmatmul.mubr.f32.gmra.mrb[0].mxu0 %v1609
  %v1683 = vpop.f32.mrb[0].mxu0
  %v1684 = vadd.f32 0.0, %v1683
  %v1685 = vpop.f32.mrb[0].mxu0
  %v1686 = vadd.f32 0.0, %v1685
  %1687 = vdwg.mxu0
  %v1688 = vadd.f32 %v1599, %v1684
  %v1689 = vadd.f32 %v1600, %v1686
  %1690 = vrot.lane.b32.xlu0 %v986, 94
  %v1691 = vpop.permute.xlu0 %1690
  %1692 = vrot.lane.b32.xlu0 %v989, 94
  %v1693 = vpop.permute.xlu0 %1692
  %v1694 = vsel %vm746, %v1691, %v1693
  %v1695 = vsel %vm746, %v1693, %v1691
  %v1696 = vld [vmem:[%s749] sm:$0xff]
  %v1698 = vsel %vm36, %v1696, 0
  %v1701 = vsel %vm40, %v1694, 0
  %v1704 = vsel %vm40, %v1695, 0
  %1706 = vmatprep.subr.mxu0 %v1704
  %1707 = vmatpush1.msra.mxu0 %v1701
  %1708 = vmatprep.subr.mxu0 0.0
  %1709 = vmatpush1.msra.mxu0 0.0
  %1710 = vmatprep.subr.mxu0 0.0
  %1711 = vmatpush1.msra.mxu0 0.0
  %1712 = vmatprep.subr.mxu0 0.0
  %1713 = vmatpush1.msra.mxu0 0.0
  %1714 = vmatprep.subr.mxu0 0.0
  %1715 = vmatpush1.msra.mxu0 0.0
  %1716 = vmatprep.subr.mxu0 0.0
  %1717 = vmatpush1.msra.mxu0 0.0
  %1718 = vmatprep.subr.mxu0 0.0
  %1719 = vmatpush1.msra.mxu0 0.0
  %1720 = vmatprep.subr.mxu0 0.0
  %1721 = vmatpush1.msra.mxu0 0.0
  %1722 = vmatprep.subr.mxu0 0.0
  %1723 = vmatpush1.msra.mxu0 0.0
  %1724 = vmatprep.subr.mxu0 0.0
  %1725 = vmatpush1.msra.mxu0 0.0
  %1726 = vmatprep.subr.mxu0 0.0
  %1727 = vmatpush1.msra.mxu0 0.0
  %1728 = vmatprep.subr.mxu0 0.0
  %1729 = vmatpush1.msra.mxu0 0.0
  %1730 = vmatprep.subr.mxu0 0.0
  %1731 = vmatpush1.msra.mxu0 0.0
  %1732 = vmatprep.subr.mxu0 0.0
  %1733 = vmatpush1.msra.mxu0 0.0
  %1734 = vmatprep.subr.mxu0 0.0
  %1735 = vmatpush1.msra.mxu0 0.0
  %1736 = vmatprep.subr.mxu0 0.0
  %1737 = vmatpush1.msra.mxu0 0.0
  %1738 = vmatprep.subr.mxu0 0.0
  %1739 = vmatpush1.msra.mxu0 0.0
  %1740 = vmatprep.subr.mxu0 0.0
  %1741 = vmatpush1.msra.mxu0 0.0
  %1742 = vmatprep.subr.mxu0 0.0
  %1743 = vmatpush1.msra.mxu0 0.0
  %1744 = vmatprep.subr.mxu0 0.0
  %1745 = vmatpush1.msra.mxu0 0.0
  %1746 = vmatprep.subr.mxu0 0.0
  %1747 = vmatpush1.msra.mxu0 0.0
  %1748 = vmatprep.subr.mxu0 0.0
  %1749 = vmatpush1.msra.mxu0 0.0
  %1750 = vmatprep.subr.mxu0 0.0
  %1751 = vmatpush1.msra.mxu0 0.0
  %1752 = vmatprep.subr.mxu0 0.0
  %1753 = vmatpush1.msra.mxu0 0.0
  %1754 = vmatprep.subr.mxu0 0.0
  %1755 = vmatpush1.msra.mxu0 0.0
  %1756 = vmatprep.subr.mxu0 0.0
  %1757 = vmatpush1.msra.mxu0 0.0
  %1758 = vmatprep.subr.mxu0 0.0
  %1759 = vmatpush1.msra.mxu0 0.0
  %1760 = vmatprep.subr.mxu0 0.0
  %1761 = vmatpush1.msra.mxu0 0.0
  %1762 = vmatprep.subr.mxu0 0.0
  %1763 = vmatpush1.msra.mxu0 0.0
  %1764 = vmatprep.subr.mxu0 0.0
  %1765 = vmatpush1.msra.mxu0 0.0
  %1766 = vmatprep.subr.mxu0 0.0
  %1767 = vmatpush1.msra.mxu0 0.0
  %1768 = vmatprep.subr.mxu0 0.0
  %1769 = vmatpush1.msra.mxu0 0.0
  %1770 = vmatprep.mubr.f32.mxu0 0.0
  %1771 = vmatmul.mubr.f32.gmra.mrb[0].mxu0 %v1698
  %v1772 = vpop.f32.mrb[0].mxu0
  %v1773 = vadd.f32 0.0, %v1772
  %v1774 = vpop.f32.mrb[0].mxu0
  %v1775 = vadd.f32 0.0, %v1774
  %1776 = vdwg.mxu0
  %v1777 = vadd.f32 %v1688, %v1773
  %v1778 = vadd.f32 %v1689, %v1775
  %v1779 = vld [vmem:[%s2] sm:$0xff]
  %1781 = vset.pattern.permute.xlu0 0
  %1782 = vperm.xlu0 %1781, %v1779
  %v1783 = vpop.permute.xlu0 %1782
  %v1785 = vadd.f32 %v1777, %v1783
  %v1786 = vadd.f32 %v1778, %v1783
  %v1787 = vxor.u32 %v1785, 2147483648
  %v1788 = vxor.u32 %v1786, 2147483648
  %v1789 = vmul.f32 %v1787, 1.442695
  %v1790 = vpow.pop %v1789
  %v1791 = vmul.f32 %v1788, 1.442695
  %v1792 = vpow.pop %v1791
  %v1793 = vadd.f32 %v1790, 1.0
  %v1794 = vadd.f32 %v1792, 1.0
  %v1795 = vrcp.pop %v1793
  %v1796 = vmul.f32 1.0, %v1795
  %v1797 = vrcp.pop %v1794
  %v1798 = vmul.f32 1.0, %v1797
  %v1799 = vmul.f32 %v1785, %v1796
  %v1800 = vmul.f32 %v1786, %v1798
  %v1801 = vld [vmem:[%s3] sm:$0xff]
  %v1802 = vld [vmem:[%s3 + $0x8] sm:$0xff]
  %v1803 = vld [vmem:[%s4] sm:$0xff]
  %v1804 = vld [vmem:[%s4 + $0x8] sm:$0xff]
  %1806 = vset.pattern.permute.xlu0 0
  %1807 = vperm.xlu0 %1806, %v1803
  %v1808 = vpop.permute.xlu0 %1807
  %1811 = vset.pattern.permute.xlu0 0
  %1812 = vperm.xlu0 %1811, %v1804
  %v1813 = vpop.permute.xlu0 %1812
  %v1816 = vsel %vm869, %v1801, 0
  %v1819 = vsel %vm869, %v1802, 0
  %1821 = vmatprep.subr.mxu0 %v1800
  %1822 = vmatpush1.msra.mxu0 %v1799
  %1823 = vmatprep.subr.mxu0 0.0
  %1824 = vmatpush1.msra.mxu0 0.0
  %1825 = vmatprep.subr.mxu0 0.0
  %1826 = vmatpush1.msra.mxu0 0.0
  %1827 = vmatprep.subr.mxu0 0.0
  %1828 = vmatpush1.msra.mxu0 0.0
  %1829 = vmatprep.subr.mxu0 0.0
  %1830 = vmatpush1.msra.mxu0 0.0
  %1831 = vmatprep.subr.mxu0 0.0
  %1832 = vmatpush1.msra.mxu0 0.0
  %1833 = vmatprep.subr.mxu0 0.0
  %1834 = vmatpush1.msra.mxu0 0.0
  %1835 = vmatprep.subr.mxu0 0.0
  %1836 = vmatpush1.msra.mxu0 0.0
  %1837 = vmatprep.subr.mxu0 0.0
  %1838 = vmatpush1.msra.mxu0 0.0
  %1839 = vmatprep.subr.mxu0 0.0
  %1840 = vmatpush1.msra.mxu0 0.0
  %1841 = vmatprep.subr.mxu0 0.0
  %1842 = vmatpush1.msra.mxu0 0.0
  %1843 = vmatprep.subr.mxu0 0.0
  %1844 = vmatpush1.msra.mxu0 0.0
  %1845 = vmatprep.subr.mxu0 0.0
  %1846 = vmatpush1.msra.mxu0 0.0
  %1847 = vmatprep.subr.mxu0 0.0
  %1848 = vmatpush1.msra.mxu0 0.0
  %1849 = vmatprep.subr.mxu0 0.0
  %1850 = vmatpush1.msra.mxu0 0.0
  %1851 = vmatprep.subr.mxu0 0.0
  %1852 = vmatpush1.msra.mxu0 0.0
  %1853 = vmatprep.subr.mxu0 0.0
  %1854 = vmatpush1.msra.mxu0 0.0
  %1855 = vmatprep.subr.mxu0 0.0
  %1856 = vmatpush1.msra.mxu0 0.0
  %1857 = vmatprep.subr.mxu0 0.0
  %1858 = vmatpush1.msra.mxu0 0.0
  %1859 = vmatprep.subr.mxu0 0.0
  %1860 = vmatpush1.msra.mxu0 0.0
  %1861 = vmatprep.subr.mxu0 0.0
  %1862 = vmatpush1.msra.mxu0 0.0
  %1863 = vmatprep.subr.mxu0 0.0
  %1864 = vmatpush1.msra.mxu0 0.0
  %1865 = vmatprep.subr.mxu0 0.0
  %1866 = vmatpush1.msra.mxu0 0.0
  %1867 = vmatprep.subr.mxu0 0.0
  %1868 = vmatpush1.msra.mxu0 0.0
  %1869 = vmatprep.subr.mxu0 0.0
  %1870 = vmatpush1.msra.mxu0 0.0
  %1871 = vmatprep.subr.mxu0 0.0
  %1872 = vmatpush1.msra.mxu0 0.0
  %1873 = vmatprep.subr.mxu0 0.0
  %1874 = vmatpush1.msra.mxu0 0.0
  %1875 = vmatprep.subr.mxu0 0.0
  %1876 = vmatpush1.msra.mxu0 0.0
  %1877 = vmatprep.subr.mxu0 0.0
  %1878 = vmatpush1.msra.mxu0 0.0
  %1879 = vmatprep.subr.mxu0 0.0
  %1880 = vmatpush1.msra.mxu0 0.0
  %1881 = vmatprep.subr.mxu0 0.0
  %1882 = vmatpush1.msra.mxu0 0.0
  %1883 = vmatprep.subr.mxu0 0.0
  %1884 = vmatpush1.msra.mxu0 0.0
  %1885 = vmatprep.mubr.f32.mxu0 0.0
  %1886 = vmatmul.mubr.f32.gmra.mrb[0].mxu0 %v1816
  %v1887 = vpop.f32.mrb[0].mxu0
  %v1888 = vadd.f32 %v1808, %v1887
  %v1889 = vpop.f32.mrb[0].mxu0
  %v1890 = vadd.f32 %v1808, %v1889
  %1891 = vmatprep.mubr.f32.mxu0 0.0
  %1892 = vmatmul.mubr.f32.gmra.mrb[0].mxu0 %v1819
  %v1893 = vpop.f32.mrb[0].mxu0
  %v1894 = vadd.f32 %v1813, %v1893
  %v1895 = vpop.f32.mrb[0].mxu0
  %v1896 = vadd.f32 %v1813, %v1895
  %1897 = vdwg.mxu0
  %v1898 = vxor.u32 %v1888, 2147483648
  %v1899 = vxor.u32 %v1890, 2147483648
  %v1900 = vxor.u32 %v1894, 2147483648
  %v1901 = vxor.u32 %v1896, 2147483648
  %v1902 = vmul.f32 %v1898, 1.442695
  %v1903 = vpow.pop %v1902
  %v1904 = vmul.f32 %v1899, 1.442695
  %v1905 = vpow.pop %v1904
  %v1906 = vmul.f32 %v1900, 1.442695
  %v1907 = vpow.pop %v1906
  %v1908 = vmul.f32 %v1901, 1.442695
  %v1909 = vpow.pop %v1908
  %v1910 = vadd.f32 %v1903, 1.0
  %v1911 = vadd.f32 %v1905, 1.0
  %v1912 = vadd.f32 %v1907, 1.0
  %v1913 = vadd.f32 %v1909, 1.0
  %v1914 = vrcp.pop %v1910
  %v1915 = vmul.f32 1.0, %v1914
  %v1916 = vrcp.pop %v1911
  %v1917 = vmul.f32 1.0, %v1916
  %v1918 = vrcp.pop %v1912
  %v1919 = vmul.f32 1.0, %v1918
  %v1920 = vrcp.pop %v1913
  %v1921 = vmul.f32 1.0, %v1920
  %v1922 = vmul.f32 %v1888, %v1915
  %v1923 = vmul.f32 %v1890, %v1917
  %v1924 = vmul.f32 %v1894, %v1919
  %v1925 = vmul.f32 %v1896, %v1921
  %s1926 = scalar_lea.vmem %s5, 32
  %1927 = vst [vmem:[%s1926] sm:$0xff] %v1922
  %1928 = vst [vmem:[%s1926 + $0x8] sm:$0xff] %v1923
  %1929 = vst [vmem:[%s1926 + $0x10] sm:$0xff] %v1924
  %1930 = vst [vmem:[%s1926 + $0x18] sm:$0xff] %v1925
  // Predicated region
  $region22: #{test_model_forward.1} parent=0 // pred_check
    _
  $region23: #{test_model_forward.1} parent=0 // pred_check_branch
    %1932 = sbr.rel (0) target = $region25
  $region24: #{test_model_forward.1} parent=0 // pred_region
    _
  $region25: #{test_model_forward.1} parent=0 // pred_fallthru
    _
  // Predicated region
  $region26: #{test_model_forward.1} parent=0 // pred_check
    _
  $region27: #{test_model_forward.1} parent=0 // pred_check_branch
    %1934 = sbr.rel (0) target = $region29
  $region28: #{test_model_forward.1} parent=0 // pred_region
    _
  $region29: #{test_model_forward.1} parent=0 // pred_fallthru
    _

</llo_original>
